<compile_context>
chip_gen: v6e
topology: v6e:2x2x1
jax: 0.10.0
libtpu: 0.0.40
codegen_flags: <defaults>
</compile_context>

<pallas_src>
import functools
import math

import jax
import jax.numpy as jnp
from jax import lax
from jax.experimental import pallas as pl
from jax.experimental.pallas import tpu as pltpu

NUM_MODELS = 4
NUM_CLASSES = 1
HIDDEN_SCALE = 2

INPUT_SIZE = NUM_MODELS * NUM_CLASSES      # 4
HIDDEN_SIZE = HIDDEN_SCALE * INPUT_SIZE    # 8

LANE = 128                     # TPU vreg lane width
CHUNK_ROWS = 32                # in-kernel strip-mine: 32x128 samples per chunk
DEFAULT_BLOCK_ROWS = 1024      # 1024*128 = 128K samples / grid step (~5 MiB VMEM dbl-buffered)


def _cdiv(a, b):
    return -(-a // b)


def _round_up(a, b):
    return _cdiv(a, b) * b


def _default_compute_dtype():
    """bf16 VALU path on v6e/v7x; f32 elsewhere (v5e has no bf16 VALU)."""
    try:
        kind = jax.devices()[0].device_kind.lower()
    except Exception:
        return jnp.dtype(jnp.float32)
    if "v6" in kind or "v7" in kind:
        return jnp.dtype(jnp.bfloat16)
    return jnp.dtype(jnp.float32)


def _meta_mlp_kernel(x_ref, w1_ref, b1_ref, w2_ref, b2_ref, w3_ref, b3_ref,
                     o_ref):
    """Fused relu(fc1) -> relu(fc2) -> sigmoid(fc3), batch on the lane axis.

    x_ref : VMEM (INPUT_SIZE, TR, 128)  feature-major, lane-dense batch tile
    w*_ref: SMEM (out, in) f32,  b*_ref: SMEM (out,) f32
    o_ref : VMEM (TR, 128) f32
    """
    cdt = x_ref.dtype
    tile_rows = x_ref.shape[1]
    n_chunks = tile_rows // CHUNK_ROWS

    # Hoist all weight/bias scalar reads (and their cast to the compute dtype)
    # out of the chunk loop: ~80 scalar-unit ops, once per grid step.
    w1 = [[w1_ref[j, i].astype(cdt) for i in range(INPUT_SIZE)]
          for j in range(HIDDEN_SIZE)]
    b1 = [b1_ref[j].astype(cdt) for j in range(HIDDEN_SIZE)]
    w2 = [[w2_ref[k, j].astype(cdt) for j in range(HIDDEN_SIZE)]
          for k in range(INPUT_SIZE)]
    b2 = [b2_ref[k].astype(cdt) for k in range(INPUT_SIZE)]
    # sigmoid(z) = 1/(1+exp(-z)): accumulate -z directly with negated fc3
    # params (trace-time scalar negation saves a per-sample VPU op).
    w3n = [-w3_ref[0, k] for k in range(INPUT_SIZE)]    # f32
    b3n = -b3_ref[0]                                    # f32

    def process_chunk(c, carry):
        r0 = pl.multiple_of(c * CHUNK_ROWS, CHUNK_ROWS)
        x = [x_ref[i, pl.ds(r0, CHUNK_ROWS), :] for i in range(INPUT_SIZE)]

        # fc1 (+ReLU) fused with the fc2 accumulation: each h1_j is consumed
        # immediately, so only x (4) + h2 partials (4) + one temp stay live.
        h2 = [None] * INPUT_SIZE
        for j in range(HIDDEN_SIZE):
            s = x[0] * w1[j][0] + b1[j]
            for i in range(1, INPUT_SIZE):
                s = s + x[i] * w1[j][i]
            h1j = jnp.maximum(s, 0.0)
            for k in range(INPUT_SIZE):
                if j == 0:
                    h2[k] = h1j * w2[k][0] + b2[k]
                else:
                    h2[k] = h2[k] + h1j * w2[k][j]

        # ReLU(fc2) -> fc3 -> sigmoid in f32 (only ~12 of ~150 ops/sample).
        z_neg = None
        for k in range(INPUT_SIZE):
            h2k = jnp.maximum(h2[k], 0.0).astype(jnp.float32)
            if k == 0:
                z_neg = h2k * w3n[0] + b3n
            else:
                z_neg = z_neg + h2k * w3n[k]
        # exp and the approximate reciprocal both live on the EUP slot.
        o_ref[pl.ds(r0, CHUNK_ROWS), :] = pl.reciprocal(
            1.0 + jnp.exp(z_neg), approx=True)
        return carry

    lax.fori_loop(0, n_chunks, process_chunk, None)


def meta_model_forward_feature_major(xt, params, *,
                                     block_rows=DEFAULT_BLOCK_ROWS,
                                     compute_dtype=None):
    """Feature-major input xt: (INPUT_SIZE, B) -> (B, 1) f32 probabilities."""
    w1, b1, w2, b2, w3, b3 = (jnp.asarray(p, jnp.float32) for p in params)
    nfeat, batch = xt.shape
    assert nfeat == INPUT_SIZE
    assert block_rows % CHUNK_ROWS == 0, "tile must be whole 32-row chunks"

    cdt = (jnp.dtype(compute_dtype) if compute_dtype is not None
           else _default_compute_dtype())

    rows = _cdiv(batch, LANE)                       # 128-sample lane rows
    tile_rows = min(block_rows, _round_up(rows, CHUNK_ROWS))
    # Keep >= 2 grid steps whenever there is enough work to split, so v7x's two
    # TensorCores both get a share of the batch axis.
    if tile_rows >= rows and rows >= 2 * CHUNK_ROWS:
        tile_rows = _round_up(_cdiv(rows, 2), CHUNK_ROWS)
    grid_rows = _cdiv(rows, tile_rows)
    rows_padded = tile_rows * grid_rows
    padded_batch = rows_padded * LANE

    # Layout plumbing (fuses into one XLA copy pass when the caller is jitted):
    # cast -> zero-pad the batch -> fold into dense (4, rows, 128) lane planes.
    x3 = jnp.pad(xt.astype(cdt), ((0, 0), (0, padded_batch - batch))
                 ).reshape(INPUT_SIZE, rows_padded, LANE)

    smem = pl.BlockSpec(memory_space=pltpu.MemorySpace.SMEM)

    in_bytes = INPUT_SIZE * tile_rows * LANE * x3.dtype.itemsize
    out_bytes = tile_rows * LANE * 4
    vmem_needed = 2 * (in_bytes + out_bytes)        # double-buffered pipeline
    compiler_kwargs = dict(dimension_semantics=("parallel",))
    # TODO(synk): on v7x consider pltpu.CORE_PARALLEL (or an explicit core_map
    # split of the batch grid) if plain "parallel" does not shard across both TCs.
    if vmem_needed > (12 << 20):    # only override near v5e's 16 MiB scoped default
        compiler_kwargs["vmem_limit_bytes"] = min(vmem_needed + (8 << 20), 48 << 20)

    out = pl.pallas_call(
        _meta_mlp_kernel,
        out_shape=jax.ShapeDtypeStruct((rows_padded, LANE), jnp.float32),
        grid_spec=pl.GridSpec(
            grid=(grid_rows,),
            in_specs=[
                pl.BlockSpec((INPUT_SIZE, tile_rows, LANE), lambda g: (0, g, 0)),
                smem, smem, smem, smem, smem, smem,
            ],
            out_specs=pl.BlockSpec((tile_rows, LANE), lambda g: (g, 0)),
        ),
        compiler_params=pltpu.CompilerParams(**compiler_kwargs),
        cost_estimate=pl.CostEstimate(
            flops=2 * padded_batch * (INPUT_SIZE * HIDDEN_SIZE
                                      + HIDDEN_SIZE * INPUT_SIZE + INPUT_SIZE),
            transcendentals=2 * padded_batch,        # exp + reciprocal / sample
            bytes_accessed=padded_batch * (INPUT_SIZE * x3.dtype.itemsize + 4)
                           + (w1.size + b1.size + w2.size + b2.size
                              + w3.size + b3.size) * 4,
        ),
    )(x3, w1, b1, w2, b2, w3, b3)

    return out.reshape(padded_batch)[:batch].reshape(batch, 1)


@functools.partial(jax.jit, static_argnames=("block_rows", "compute_dtype"))
def meta_model_forward(x, params, *, block_rows=DEFAULT_BLOCK_ROWS,
                       compute_dtype=None):
    """Batch-major x: (B, 4) or (B, num_models, num_classes) -> (B, 1)."""
    if x.ndim == 3:                      # torch forward's flattened=False path
        x = x.reshape(x.shape[0], -1)
    assert x.shape[1] == INPUT_SIZE
    # TODO(synk): torch forward has a debug `print(x)`; not replicated.
    return meta_model_forward_feature_major(
        x.T, params, block_rows=block_rows, compute_dtype=compute_dtype)


def init_params(key):
    """nn.Linear-style U(-1/sqrt(fan_in), 1/sqrt(fan_in)); weights in PyTorch
    (out_features, in_features) convention, biases 1-D."""
    ks = jax.random.split(key, 6)

    def linear(kw, kb, fan_in, fan_out):
        bound = 1.0 / math.sqrt(fan_in)
        w = jax.random.uniform(kw, (fan_out, fan_in), jnp.float32,
                               minval=-bound, maxval=bound)
        b = jax.random.uniform(kb, (fan_out,), jnp.float32,
                               minval=-bound, maxval=bound)
        return w, b

    w1, b1 = linear(ks[0], ks[1], INPUT_SIZE, HIDDEN_SIZE)   # fc1: 4 -> 8
    w2, b2 = linear(ks[2], ks[3], HIDDEN_SIZE, INPUT_SIZE)   # fc2: 8 -> 4
    w3, b3 = linear(ks[4], ks[5], INPUT_SIZE, 1)             # fc3: 4 -> 1
    return w1, b1, w2, b2, w3, b3


def reference_forward(x, params):
    w1, b1, w2, b2, w3, b3 = params
    h1 = jnp.maximum(x @ w1.T + b1, 0.0)
    h2 = jnp.maximum(h1 @ w2.T + b2, 0.0)
    return jax.nn.sigmoid(h2 @ w3.T + b3)


if __name__ == "__main__":
    key = jax.random.PRNGKey(0)
    k_params, k_x1, k_x2 = jax.random.split(key, 3)
    params = init_params(k_params)

    cdt = _default_compute_dtype()
    # approx EUP reciprocal ~1e-3; bf16 VALU path adds ~1e-2-level error.
    atol_default = 5e-3 if cdt == jnp.dtype(jnp.float32) else 3e-2

    # Small case (batch=8): single tile, partial lane row, zero-padded.
    x_small = jax.random.normal(k_x1, (8, INPUT_SIZE), jnp.float32)
    ref_small = reference_forward(x_small, params)

    out_small_f32 = jax.block_until_ready(
        meta_model_forward(x_small, params, compute_dtype=jnp.float32))
    assert out_small_f32.shape == (8, 1)
    assert jnp.allclose(out_small_f32, ref_small, atol=5e-3, rtol=1e-3)

    out_small = jax.block_until_ready(meta_model_forward(x_small, params))
    assert out_small.shape == (8, 1)
    assert jnp.allclose(out_small, ref_small, atol=atol_default)

    # Larger case: exercises padding + the multi-tile batch grid
    # (157 lane rows -> 2 tiles of 96 rows by default, 3 tiles of 64 rows below).
    x_big = jax.random.normal(k_x2, (20000, INPUT_SIZE), jnp.float32)
    ref_big = reference_forward(x_big, params)

    out_big = jax.block_until_ready(meta_model_forward(x_big, params))
    assert out_big.shape == (20000, 1)
    assert jnp.allclose(out_big, ref_big, atol=atol_default)

    out_big_t64 = jax.block_until_ready(
        meta_model_forward(x_big, params, block_rows=64,
                           compute_dtype=jnp.float32))
    assert jnp.allclose(out_big_t64, ref_big, atol=5e-3, rtol=1e-3)

    print("KERNEL_OK")
</pallas_src>

<mosaic_0001>
module attributes {stable_mosaic.version = 11 : i64} {
  func.func @_meta_mlp_kernel(%arg0: i32, %arg1: memref<4x32x128xf32, #tpu.memory_space<vmem>>, %arg2: memref<8x4xf32, #tpu.memory_space<smem>>, %arg3: memref<8xf32, #tpu.memory_space<smem>>, %arg4: memref<4x8xf32, #tpu.memory_space<smem>>, %arg5: memref<4xf32, #tpu.memory_space<smem>>, %arg6: memref<1x4xf32, #tpu.memory_space<smem>>, %arg7: memref<1xf32, #tpu.memory_space<smem>>, %arg8: memref<32x128xf32, #tpu.memory_space<vmem>>) attributes {dimension_semantics = [#tpu.dimension_semantics<parallel>], iteration_bounds = array<i64: 1>, scalar_prefetch = 0 : i64, scratch_operands = 0 : i64, tpu.core_type = #tpu.core_type<tc>, window_params = [{transform_indices = @transform_0, window_bounds = array<i64: 4, 32, 128>}, {transform_indices = @transform_1, window_bounds = array<i64: 8, 4>}, {transform_indices = @transform_2, window_bounds = array<i64: 8>}, {transform_indices = @transform_3, window_bounds = array<i64: 4, 8>}, {transform_indices = @transform_4, window_bounds = array<i64: 4>}, {transform_indices = @transform_5, window_bounds = array<i64: 1, 4>}, {transform_indices = @transform_6, window_bounds = array<i64: 1>}, {transform_indices = @transform_7, window_bounds = array<i64: 32, 128>}]} {
    %c0 = arith.constant 0 : index
    %c0_0 = arith.constant 0 : index
    %0 = memref.load %arg2[%c0, %c0_0] : memref<8x4xf32, #tpu.memory_space<smem>>
    %c0_1 = arith.constant 0 : index
    %c1 = arith.constant 1 : index
    %1 = memref.load %arg2[%c0_1, %c1] : memref<8x4xf32, #tpu.memory_space<smem>>
    %c0_2 = arith.constant 0 : index
    %c2 = arith.constant 2 : index
    %2 = memref.load %arg2[%c0_2, %c2] : memref<8x4xf32, #tpu.memory_space<smem>>
    %c0_3 = arith.constant 0 : index
    %c3 = arith.constant 3 : index
    %3 = memref.load %arg2[%c0_3, %c3] : memref<8x4xf32, #tpu.memory_space<smem>>
    %c1_4 = arith.constant 1 : index
    %c0_5 = arith.constant 0 : index
    %4 = memref.load %arg2[%c1_4, %c0_5] : memref<8x4xf32, #tpu.memory_space<smem>>
    %c1_6 = arith.constant 1 : index
    %c1_7 = arith.constant 1 : index
    %5 = memref.load %arg2[%c1_6, %c1_7] : memref<8x4xf32, #tpu.memory_space<smem>>
    %c1_8 = arith.constant 1 : index
    %c2_9 = arith.constant 2 : index
    %6 = memref.load %arg2[%c1_8, %c2_9] : memref<8x4xf32, #tpu.memory_space<smem>>
    %c1_10 = arith.constant 1 : index
    %c3_11 = arith.constant 3 : index
    %7 = memref.load %arg2[%c1_10, %c3_11] : memref<8x4xf32, #tpu.memory_space<smem>>
    %c2_12 = arith.constant 2 : index
    %c0_13 = arith.constant 0 : index
    %8 = memref.load %arg2[%c2_12, %c0_13] : memref<8x4xf32, #tpu.memory_space<smem>>
    %c2_14 = arith.constant 2 : index
    %c1_15 = arith.constant 1 : index
    %9 = memref.load %arg2[%c2_14, %c1_15] : memref<8x4xf32, #tpu.memory_space<smem>>
    %c2_16 = arith.constant 2 : index
    %c2_17 = arith.constant 2 : index
    %10 = memref.load %arg2[%c2_16, %c2_17] : memref<8x4xf32, #tpu.memory_space<smem>>
    %c2_18 = arith.constant 2 : index
    %c3_19 = arith.constant 3 : index
    %11 = memref.load %arg2[%c2_18, %c3_19] : memref<8x4xf32, #tpu.memory_space<smem>>
    %c3_20 = arith.constant 3 : index
    %c0_21 = arith.constant 0 : index
    %12 = memref.load %arg2[%c3_20, %c0_21] : memref<8x4xf32, #tpu.memory_space<smem>>
    %c3_22 = arith.constant 3 : index
    %c1_23 = arith.constant 1 : index
    %13 = memref.load %arg2[%c3_22, %c1_23] : memref<8x4xf32, #tpu.memory_space<smem>>
    %c3_24 = arith.constant 3 : index
    %c2_25 = arith.constant 2 : index
    %14 = memref.load %arg2[%c3_24, %c2_25] : memref<8x4xf32, #tpu.memory_space<smem>>
    %c3_26 = arith.constant 3 : index
    %c3_27 = arith.constant 3 : index
    %15 = memref.load %arg2[%c3_26, %c3_27] : memref<8x4xf32, #tpu.memory_space<smem>>
    %c4 = arith.constant 4 : index
    %c0_28 = arith.constant 0 : index
    %16 = memref.load %arg2[%c4, %c0_28] : memref<8x4xf32, #tpu.memory_space<smem>>
    %c4_29 = arith.constant 4 : index
    %c1_30 = arith.constant 1 : index
    %17 = memref.load %arg2[%c4_29, %c1_30] : memref<8x4xf32, #tpu.memory_space<smem>>
    %c4_31 = arith.constant 4 : index
    %c2_32 = arith.constant 2 : index
    %18 = memref.load %arg2[%c4_31, %c2_32] : memref<8x4xf32, #tpu.memory_space<smem>>
    %c4_33 = arith.constant 4 : index
    %c3_34 = arith.constant 3 : index
    %19 = memref.load %arg2[%c4_33, %c3_34] : memref<8x4xf32, #tpu.memory_space<smem>>
    %c5 = arith.constant 5 : index
    %c0_35 = arith.constant 0 : index
    %20 = memref.load %arg2[%c5, %c0_35] : memref<8x4xf32, #tpu.memory_space<smem>>
    %c5_36 = arith.constant 5 : index
    %c1_37 = arith.constant 1 : index
    %21 = memref.load %arg2[%c5_36, %c1_37] : memref<8x4xf32, #tpu.memory_space<smem>>
    %c5_38 = arith.constant 5 : index
    %c2_39 = arith.constant 2 : index
    %22 = memref.load %arg2[%c5_38, %c2_39] : memref<8x4xf32, #tpu.memory_space<smem>>
    %c5_40 = arith.constant 5 : index
    %c3_41 = arith.constant 3 : index
    %23 = memref.load %arg2[%c5_40, %c3_41] : memref<8x4xf32, #tpu.memory_space<smem>>
    %c6 = arith.constant 6 : index
    %c0_42 = arith.constant 0 : index
    %24 = memref.load %arg2[%c6, %c0_42] : memref<8x4xf32, #tpu.memory_space<smem>>
    %c6_43 = arith.constant 6 : index
    %c1_44 = arith.constant 1 : index
    %25 = memref.load %arg2[%c6_43, %c1_44] : memref<8x4xf32, #tpu.memory_space<smem>>
    %c6_45 = arith.constant 6 : index
    %c2_46 = arith.constant 2 : index
    %26 = memref.load %arg2[%c6_45, %c2_46] : memref<8x4xf32, #tpu.memory_space<smem>>
    %c6_47 = arith.constant 6 : index
    %c3_48 = arith.constant 3 : index
    %27 = memref.load %arg2[%c6_47, %c3_48] : memref<8x4xf32, #tpu.memory_space<smem>>
    %c7 = arith.constant 7 : index
    %c0_49 = arith.constant 0 : index
    %28 = memref.load %arg2[%c7, %c0_49] : memref<8x4xf32, #tpu.memory_space<smem>>
    %c7_50 = arith.constant 7 : index
    %c1_51 = arith.constant 1 : index
    %29 = memref.load %arg2[%c7_50, %c1_51] : memref<8x4xf32, #tpu.memory_space<smem>>
    %c7_52 = arith.constant 7 : index
    %c2_53 = arith.constant 2 : index
    %30 = memref.load %arg2[%c7_52, %c2_53] : memref<8x4xf32, #tpu.memory_space<smem>>
    %c7_54 = arith.constant 7 : index
    %c3_55 = arith.constant 3 : index
    %31 = memref.load %arg2[%c7_54, %c3_55] : memref<8x4xf32, #tpu.memory_space<smem>>
    %c0_56 = arith.constant 0 : index
    %32 = memref.load %arg3[%c0_56] : memref<8xf32, #tpu.memory_space<smem>>
    %c1_57 = arith.constant 1 : index
    %33 = memref.load %arg3[%c1_57] : memref<8xf32, #tpu.memory_space<smem>>
    %c2_58 = arith.constant 2 : index
    %34 = memref.load %arg3[%c2_58] : memref<8xf32, #tpu.memory_space<smem>>
    %c3_59 = arith.constant 3 : index
    %35 = memref.load %arg3[%c3_59] : memref<8xf32, #tpu.memory_space<smem>>
    %c4_60 = arith.constant 4 : index
    %36 = memref.load %arg3[%c4_60] : memref<8xf32, #tpu.memory_space<smem>>
    %c5_61 = arith.constant 5 : index
    %37 = memref.load %arg3[%c5_61] : memref<8xf32, #tpu.memory_space<smem>>
    %c6_62 = arith.constant 6 : index
    %38 = memref.load %arg3[%c6_62] : memref<8xf32, #tpu.memory_space<smem>>
    %c7_63 = arith.constant 7 : index
    %39 = memref.load %arg3[%c7_63] : memref<8xf32, #tpu.memory_space<smem>>
    %c0_64 = arith.constant 0 : index
    %c0_65 = arith.constant 0 : index
    %40 = memref.load %arg4[%c0_64, %c0_65] : memref<4x8xf32, #tpu.memory_space<smem>>
    %c0_66 = arith.constant 0 : index
    %c1_67 = arith.constant 1 : index
    %41 = memref.load %arg4[%c0_66, %c1_67] : memref<4x8xf32, #tpu.memory_space<smem>>
    %c0_68 = arith.constant 0 : index
    %c2_69 = arith.constant 2 : index
    %42 = memref.load %arg4[%c0_68, %c2_69] : memref<4x8xf32, #tpu.memory_space<smem>>
    %c0_70 = arith.constant 0 : index
    %c3_71 = arith.constant 3 : index
    %43 = memref.load %arg4[%c0_70, %c3_71] : memref<4x8xf32, #tpu.memory_space<smem>>
    %c0_72 = arith.constant 0 : index
    %c4_73 = arith.constant 4 : index
    %44 = memref.load %arg4[%c0_72, %c4_73] : memref<4x8xf32, #tpu.memory_space<smem>>
    %c0_74 = arith.constant 0 : index
    %c5_75 = arith.constant 5 : index
    %45 = memref.load %arg4[%c0_74, %c5_75] : memref<4x8xf32, #tpu.memory_space<smem>>
    %c0_76 = arith.constant 0 : index
    %c6_77 = arith.constant 6 : index
    %46 = memref.load %arg4[%c0_76, %c6_77] : memref<4x8xf32, #tpu.memory_space<smem>>
    %c0_78 = arith.constant 0 : index
    %c7_79 = arith.constant 7 : index
    %47 = memref.load %arg4[%c0_78, %c7_79] : memref<4x8xf32, #tpu.memory_space<smem>>
    %c1_80 = arith.constant 1 : index
    %c0_81 = arith.constant 0 : index
    %48 = memref.load %arg4[%c1_80, %c0_81] : memref<4x8xf32, #tpu.memory_space<smem>>
    %c1_82 = arith.constant 1 : index
    %c1_83 = arith.constant 1 : index
    %49 = memref.load %arg4[%c1_82, %c1_83] : memref<4x8xf32, #tpu.memory_space<smem>>
    %c1_84 = arith.constant 1 : index
    %c2_85 = arith.constant 2 : index
    %50 = memref.load %arg4[%c1_84, %c2_85] : memref<4x8xf32, #tpu.memory_space<smem>>
    %c1_86 = arith.constant 1 : index
    %c3_87 = arith.constant 3 : index
    %51 = memref.load %arg4[%c1_86, %c3_87] : memref<4x8xf32, #tpu.memory_space<smem>>
    %c1_88 = arith.constant 1 : index
    %c4_89 = arith.constant 4 : index
    %52 = memref.load %arg4[%c1_88, %c4_89] : memref<4x8xf32, #tpu.memory_space<smem>>
    %c1_90 = arith.constant 1 : index
    %c5_91 = arith.constant 5 : index
    %53 = memref.load %arg4[%c1_90, %c5_91] : memref<4x8xf32, #tpu.memory_space<smem>>
    %c1_92 = arith.constant 1 : index
    %c6_93 = arith.constant 6 : index
    %54 = memref.load %arg4[%c1_92, %c6_93] : memref<4x8xf32, #tpu.memory_space<smem>>
    %c1_94 = arith.constant 1 : index
    %c7_95 = arith.constant 7 : index
    %55 = memref.load %arg4[%c1_94, %c7_95] : memref<4x8xf32, #tpu.memory_space<smem>>
    %c2_96 = arith.constant 2 : index
    %c0_97 = arith.constant 0 : index
    %56 = memref.load %arg4[%c2_96, %c0_97] : memref<4x8xf32, #tpu.memory_space<smem>>
    %c2_98 = arith.constant 2 : index
    %c1_99 = arith.constant 1 : index
    %57 = memref.load %arg4[%c2_98, %c1_99] : memref<4x8xf32, #tpu.memory_space<smem>>
    %c2_100 = arith.constant 2 : index
    %c2_101 = arith.constant 2 : index
    %58 = memref.load %arg4[%c2_100, %c2_101] : memref<4x8xf32, #tpu.memory_space<smem>>
    %c2_102 = arith.constant 2 : index
    %c3_103 = arith.constant 3 : index
    %59 = memref.load %arg4[%c2_102, %c3_103] : memref<4x8xf32, #tpu.memory_space<smem>>
    %c2_104 = arith.constant 2 : index
    %c4_105 = arith.constant 4 : index
    %60 = memref.load %arg4[%c2_104, %c4_105] : memref<4x8xf32, #tpu.memory_space<smem>>
    %c2_106 = arith.constant 2 : index
    %c5_107 = arith.constant 5 : index
    %61 = memref.load %arg4[%c2_106, %c5_107] : memref<4x8xf32, #tpu.memory_space<smem>>
    %c2_108 = arith.constant 2 : index
    %c6_109 = arith.constant 6 : index
    %62 = memref.load %arg4[%c2_108, %c6_109] : memref<4x8xf32, #tpu.memory_space<smem>>
    %c2_110 = arith.constant 2 : index
    %c7_111 = arith.constant 7 : index
    %63 = memref.load %arg4[%c2_110, %c7_111] : memref<4x8xf32, #tpu.memory_space<smem>>
    %c3_112 = arith.constant 3 : index
    %c0_113 = arith.constant 0 : index
    %64 = memref.load %arg4[%c3_112, %c0_113] : memref<4x8xf32, #tpu.memory_space<smem>>
    %c3_114 = arith.constant 3 : index
    %c1_115 = arith.constant 1 : index
    %65 = memref.load %arg4[%c3_114, %c1_115] : memref<4x8xf32, #tpu.memory_space<smem>>
    %c3_116 = arith.constant 3 : index
    %c2_117 = arith.constant 2 : index
    %66 = memref.load %arg4[%c3_116, %c2_117] : memref<4x8xf32, #tpu.memory_space<smem>>
    %c3_118 = arith.constant 3 : index
    %c3_119 = arith.constant 3 : index
    %67 = memref.load %arg4[%c3_118, %c3_119] : memref<4x8xf32, #tpu.memory_space<smem>>
    %c3_120 = arith.constant 3 : index
    %c4_121 = arith.constant 4 : index
    %68 = memref.load %arg4[%c3_120, %c4_121] : memref<4x8xf32, #tpu.memory_space<smem>>
    %c3_122 = arith.constant 3 : index
    %c5_123 = arith.constant 5 : index
    %69 = memref.load %arg4[%c3_122, %c5_123] : memref<4x8xf32, #tpu.memory_space<smem>>
    %c3_124 = arith.constant 3 : index
    %c6_125 = arith.constant 6 : index
    %70 = memref.load %arg4[%c3_124, %c6_125] : memref<4x8xf32, #tpu.memory_space<smem>>
    %c3_126 = arith.constant 3 : index
    %c7_127 = arith.constant 7 : index
    %71 = memref.load %arg4[%c3_126, %c7_127] : memref<4x8xf32, #tpu.memory_space<smem>>
    %c0_128 = arith.constant 0 : index
    %72 = memref.load %arg5[%c0_128] : memref<4xf32, #tpu.memory_space<smem>>
    %c1_129 = arith.constant 1 : index
    %73 = memref.load %arg5[%c1_129] : memref<4xf32, #tpu.memory_space<smem>>
    %c2_130 = arith.constant 2 : index
    %74 = memref.load %arg5[%c2_130] : memref<4xf32, #tpu.memory_space<smem>>
    %c3_131 = arith.constant 3 : index
    %75 = memref.load %arg5[%c3_131] : memref<4xf32, #tpu.memory_space<smem>>
    %c0_132 = arith.constant 0 : index
    %c0_133 = arith.constant 0 : index
    %76 = memref.load %arg6[%c0_132, %c0_133] : memref<1x4xf32, #tpu.memory_space<smem>>
    %cst = arith.constant 0.000000e+00 : f32
    %77 = arith.subf %cst, %76 : f32
    %c0_134 = arith.constant 0 : index
    %c1_135 = arith.constant 1 : index
    %78 = memref.load %arg6[%c0_134, %c1_135] : memref<1x4xf32, #tpu.memory_space<smem>>
    %cst_136 = arith.constant 0.000000e+00 : f32
    %79 = arith.subf %cst_136, %78 : f32
    %c0_137 = arith.constant 0 : index
    %c2_138 = arith.constant 2 : index
    %80 = memref.load %arg6[%c0_137, %c2_138] : memref<1x4xf32, #tpu.memory_space<smem>>
    %cst_139 = arith.constant 0.000000e+00 : f32
    %81 = arith.subf %cst_139, %80 : f32
    %c0_140 = arith.constant 0 : index
    %c3_141 = arith.constant 3 : index
    %82 = memref.load %arg6[%c0_140, %c3_141] : memref<1x4xf32, #tpu.memory_space<smem>>
    %cst_142 = arith.constant 0.000000e+00 : f32
    %83 = arith.subf %cst_142, %82 : f32
    %c0_143 = arith.constant 0 : index
    %84 = memref.load %arg7[%c0_143] : memref<1xf32, #tpu.memory_space<smem>>
    %cst_144 = arith.constant 0.000000e+00 : f32
    %85 = arith.subf %cst_144, %84 : f32
    %c0_i32 = arith.constant 0 : i32
    %c32_i32 = arith.constant 32 : i32
    %86 = arith.muli %c0_i32, %c32_i32 : i32
    %87 = tpu.assume_multiple %86, 32 : i32
    %c0_145 = arith.constant 0 : index
    %88 = arith.index_cast %87 : i32 to index
    %c0_146 = arith.constant 0 : index
    %89 = vector.load %arg1[%c0_145, %88, %c0_146] : memref<4x32x128xf32, #tpu.memory_space<vmem>>, vector<1x32x128xf32>
    %90 = vector.shape_cast %89 : vector<1x32x128xf32> to vector<32x128xf32>
    %c1_147 = arith.constant 1 : index
    %91 = arith.index_cast %87 : i32 to index
    %c0_148 = arith.constant 0 : index
    %92 = vector.load %arg1[%c1_147, %91, %c0_148] : memref<4x32x128xf32, #tpu.memory_space<vmem>>, vector<1x32x128xf32>
    %93 = vector.shape_cast %92 : vector<1x32x128xf32> to vector<32x128xf32>
    %c2_149 = arith.constant 2 : index
    %94 = arith.index_cast %87 : i32 to index
    %c0_150 = arith.constant 0 : index
    %95 = vector.load %arg1[%c2_149, %94, %c0_150] : memref<4x32x128xf32, #tpu.memory_space<vmem>>, vector<1x32x128xf32>
    %96 = vector.shape_cast %95 : vector<1x32x128xf32> to vector<32x128xf32>
    %c3_151 = arith.constant 3 : index
    %97 = arith.index_cast %87 : i32 to index
    %c0_152 = arith.constant 0 : index
    %98 = vector.load %arg1[%c3_151, %97, %c0_152] : memref<4x32x128xf32, #tpu.memory_space<vmem>>, vector<1x32x128xf32>
    %99 = vector.shape_cast %98 : vector<1x32x128xf32> to vector<32x128xf32>
    %100 = vector.broadcast %0 : f32 to vector<32x128xf32>
    %101 = arith.mulf %90, %100 : vector<32x128xf32>
    %102 = vector.broadcast %32 : f32 to vector<32x128xf32>
    %103 = arith.addf %101, %102 : vector<32x128xf32>
    %104 = vector.broadcast %1 : f32 to vector<32x128xf32>
    %105 = arith.mulf %93, %104 : vector<32x128xf32>
    %106 = arith.addf %103, %105 : vector<32x128xf32>
    %107 = vector.broadcast %2 : f32 to vector<32x128xf32>
    %108 = arith.mulf %96, %107 : vector<32x128xf32>
    %109 = arith.addf %106, %108 : vector<32x128xf32>
    %110 = vector.broadcast %3 : f32 to vector<32x128xf32>
    %111 = arith.mulf %99, %110 : vector<32x128xf32>
    %112 = arith.addf %109, %111 : vector<32x128xf32>
    %cst_153 = arith.constant 0.000000e+00 : f32
    %113 = vector.broadcast %cst_153 : f32 to vector<32x128xf32>
    %114 = arith.maximumf %112, %113 : vector<32x128xf32>
    %115 = vector.broadcast %40 : f32 to vector<32x128xf32>
    %116 = arith.mulf %114, %115 : vector<32x128xf32>
    %117 = vector.broadcast %72 : f32 to vector<32x128xf32>
    %118 = arith.addf %116, %117 : vector<32x128xf32>
    %119 = vector.broadcast %48 : f32 to vector<32x128xf32>
    %120 = arith.mulf %114, %119 : vector<32x128xf32>
    %121 = vector.broadcast %73 : f32 to vector<32x128xf32>
    %122 = arith.addf %120, %121 : vector<32x128xf32>
    %123 = vector.broadcast %56 : f32 to vector<32x128xf32>
    %124 = arith.mulf %114, %123 : vector<32x128xf32>
    %125 = vector.broadcast %74 : f32 to vector<32x128xf32>
    %126 = arith.addf %124, %125 : vector<32x128xf32>
    %127 = vector.broadcast %64 : f32 to vector<32x128xf32>
    %128 = arith.mulf %114, %127 : vector<32x128xf32>
    %129 = vector.broadcast %75 : f32 to vector<32x128xf32>
    %130 = arith.addf %128, %129 : vector<32x128xf32>
    %131 = vector.broadcast %4 : f32 to vector<32x128xf32>
    %132 = arith.mulf %90, %131 : vector<32x128xf32>
    %133 = vector.broadcast %33 : f32 to vector<32x128xf32>
    %134 = arith.addf %132, %133 : vector<32x128xf32>
    %135 = vector.broadcast %5 : f32 to vector<32x128xf32>
    %136 = arith.mulf %93, %135 : vector<32x128xf32>
    %137 = arith.addf %134, %136 : vector<32x128xf32>
    %138 = vector.broadcast %6 : f32 to vector<32x128xf32>
    %139 = arith.mulf %96, %138 : vector<32x128xf32>
    %140 = arith.addf %137, %139 : vector<32x128xf32>
    %141 = vector.broadcast %7 : f32 to vector<32x128xf32>
    %142 = arith.mulf %99, %141 : vector<32x128xf32>
    %143 = arith.addf %140, %142 : vector<32x128xf32>
    %cst_154 = arith.constant 0.000000e+00 : f32
    %144 = vector.broadcast %cst_154 : f32 to vector<32x128xf32>
    %145 = arith.maximumf %143, %144 : vector<32x128xf32>
    %146 = vector.broadcast %41 : f32 to vector<32x128xf32>
    %147 = arith.mulf %145, %146 : vector<32x128xf32>
    %148 = arith.addf %118, %147 : vector<32x128xf32>
    %149 = vector.broadcast %49 : f32 to vector<32x128xf32>
    %150 = arith.mulf %145, %149 : vector<32x128xf32>
    %151 = arith.addf %122, %150 : vector<32x128xf32>
    %152 = vector.broadcast %57 : f32 to vector<32x128xf32>
    %153 = arith.mulf %145, %152 : vector<32x128xf32>
    %154 = arith.addf %126, %153 : vector<32x128xf32>
    %155 = vector.broadcast %65 : f32 to vector<32x128xf32>
    %156 = arith.mulf %145, %155 : vector<32x128xf32>
    %157 = arith.addf %130, %156 : vector<32x128xf32>
    %158 = vector.broadcast %8 : f32 to vector<32x128xf32>
    %159 = arith.mulf %90, %158 : vector<32x128xf32>
    %160 = vector.broadcast %34 : f32 to vector<32x128xf32>
    %161 = arith.addf %159, %160 : vector<32x128xf32>
    %162 = vector.broadcast %9 : f32 to vector<32x128xf32>
    %163 = arith.mulf %93, %162 : vector<32x128xf32>
    %164 = arith.addf %161, %163 : vector<32x128xf32>
    %165 = vector.broadcast %10 : f32 to vector<32x128xf32>
    %166 = arith.mulf %96, %165 : vector<32x128xf32>
    %167 = arith.addf %164, %166 : vector<32x128xf32>
    %168 = vector.broadcast %11 : f32 to vector<32x128xf32>
    %169 = arith.mulf %99, %168 : vector<32x128xf32>
    %170 = arith.addf %167, %169 : vector<32x128xf32>
    %cst_155 = arith.constant 0.000000e+00 : f32
    %171 = vector.broadcast %cst_155 : f32 to vector<32x128xf32>
    %172 = arith.maximumf %170, %171 : vector<32x128xf32>
    %173 = vector.broadcast %42 : f32 to vector<32x128xf32>
    %174 = arith.mulf %172, %173 : vector<32x128xf32>
    %175 = arith.addf %148, %174 : vector<32x128xf32>
    %176 = vector.broadcast %50 : f32 to vector<32x128xf32>
    %177 = arith.mulf %172, %176 : vector<32x128xf32>
    %178 = arith.addf %151, %177 : vector<32x128xf32>
    %179 = vector.broadcast %58 : f32 to vector<32x128xf32>
    %180 = arith.mulf %172, %179 : vector<32x128xf32>
    %181 = arith.addf %154, %180 : vector<32x128xf32>
    %182 = vector.broadcast %66 : f32 to vector<32x128xf32>
    %183 = arith.mulf %172, %182 : vector<32x128xf32>
    %184 = arith.addf %157, %183 : vector<32x128xf32>
    %185 = vector.broadcast %12 : f32 to vector<32x128xf32>
    %186 = arith.mulf %90, %185 : vector<32x128xf32>
    %187 = vector.broadcast %35 : f32 to vector<32x128xf32>
    %188 = arith.addf %186, %187 : vector<32x128xf32>
    %189 = vector.broadcast %13 : f32 to vector<32x128xf32>
    %190 = arith.mulf %93, %189 : vector<32x128xf32>
    %191 = arith.addf %188, %190 : vector<32x128xf32>
    %192 = vector.broadcast %14 : f32 to vector<32x128xf32>
    %193 = arith.mulf %96, %192 : vector<32x128xf32>
    %194 = arith.addf %191, %193 : vector<32x128xf32>
    %195 = vector.broadcast %15 : f32 to vector<32x128xf32>
    %196 = arith.mulf %99, %195 : vector<32x128xf32>
    %197 = arith.addf %194, %196 : vector<32x128xf32>
    %cst_156 = arith.constant 0.000000e+00 : f32
    %198 = vector.broadcast %cst_156 : f32 to vector<32x128xf32>
    %199 = arith.maximumf %197, %198 : vector<32x128xf32>
    %200 = vector.broadcast %43 : f32 to vector<32x128xf32>
    %201 = arith.mulf %199, %200 : vector<32x128xf32>
    %202 = arith.addf %175, %201 : vector<32x128xf32>
    %203 = vector.broadcast %51 : f32 to vector<32x128xf32>
    %204 = arith.mulf %199, %203 : vector<32x128xf32>
    %205 = arith.addf %178, %204 : vector<32x128xf32>
    %206 = vector.broadcast %59 : f32 to vector<32x128xf32>
    %207 = arith.mulf %199, %206 : vector<32x128xf32>
    %208 = arith.addf %181, %207 : vector<32x128xf32>
    %209 = vector.broadcast %67 : f32 to vector<32x128xf32>
    %210 = arith.mulf %199, %209 : vector<32x128xf32>
    %211 = arith.addf %184, %210 : vector<32x128xf32>
    %212 = vector.broadcast %16 : f32 to vector<32x128xf32>
    %213 = arith.mulf %90, %212 : vector<32x128xf32>
    %214 = vector.broadcast %36 : f32 to vector<32x128xf32>
    %215 = arith.addf %213, %214 : vector<32x128xf32>
    %216 = vector.broadcast %17 : f32 to vector<32x128xf32>
    %217 = arith.mulf %93, %216 : vector<32x128xf32>
    %218 = arith.addf %215, %217 : vector<32x128xf32>
    %219 = vector.broadcast %18 : f32 to vector<32x128xf32>
    %220 = arith.mulf %96, %219 : vector<32x128xf32>
    %221 = arith.addf %218, %220 : vector<32x128xf32>
    %222 = vector.broadcast %19 : f32 to vector<32x128xf32>
    %223 = arith.mulf %99, %222 : vector<32x128xf32>
    %224 = arith.addf %221, %223 : vector<32x128xf32>
    %cst_157 = arith.constant 0.000000e+00 : f32
    %225 = vector.broadcast %cst_157 : f32 to vector<32x128xf32>
    %226 = arith.maximumf %224, %225 : vector<32x128xf32>
    %227 = vector.broadcast %44 : f32 to vector<32x128xf32>
    %228 = arith.mulf %226, %227 : vector<32x128xf32>
    %229 = arith.addf %202, %228 : vector<32x128xf32>
    %230 = vector.broadcast %52 : f32 to vector<32x128xf32>
    %231 = arith.mulf %226, %230 : vector<32x128xf32>
    %232 = arith.addf %205, %231 : vector<32x128xf32>
    %233 = vector.broadcast %60 : f32 to vector<32x128xf32>
    %234 = arith.mulf %226, %233 : vector<32x128xf32>
    %235 = arith.addf %208, %234 : vector<32x128xf32>
    %236 = vector.broadcast %68 : f32 to vector<32x128xf32>
    %237 = arith.mulf %226, %236 : vector<32x128xf32>
    %238 = arith.addf %211, %237 : vector<32x128xf32>
    %239 = vector.broadcast %20 : f32 to vector<32x128xf32>
    %240 = arith.mulf %90, %239 : vector<32x128xf32>
    %241 = vector.broadcast %37 : f32 to vector<32x128xf32>
    %242 = arith.addf %240, %241 : vector<32x128xf32>
    %243 = vector.broadcast %21 : f32 to vector<32x128xf32>
    %244 = arith.mulf %93, %243 : vector<32x128xf32>
    %245 = arith.addf %242, %244 : vector<32x128xf32>
    %246 = vector.broadcast %22 : f32 to vector<32x128xf32>
    %247 = arith.mulf %96, %246 : vector<32x128xf32>
    %248 = arith.addf %245, %247 : vector<32x128xf32>
    %249 = vector.broadcast %23 : f32 to vector<32x128xf32>
    %250 = arith.mulf %99, %249 : vector<32x128xf32>
    %251 = arith.addf %248, %250 : vector<32x128xf32>
    %cst_158 = arith.constant 0.000000e+00 : f32
    %252 = vector.broadcast %cst_158 : f32 to vector<32x128xf32>
    %253 = arith.maximumf %251, %252 : vector<32x128xf32>
    %254 = vector.broadcast %45 : f32 to vector<32x128xf32>
    %255 = arith.mulf %253, %254 : vector<32x128xf32>
    %256 = arith.addf %229, %255 : vector<32x128xf32>
    %257 = vector.broadcast %53 : f32 to vector<32x128xf32>
    %258 = arith.mulf %253, %257 : vector<32x128xf32>
    %259 = arith.addf %232, %258 : vector<32x128xf32>
    %260 = vector.broadcast %61 : f32 to vector<32x128xf32>
    %261 = arith.mulf %253, %260 : vector<32x128xf32>
    %262 = arith.addf %235, %261 : vector<32x128xf32>
    %263 = vector.broadcast %69 : f32 to vector<32x128xf32>
    %264 = arith.mulf %253, %263 : vector<32x128xf32>
    %265 = arith.addf %238, %264 : vector<32x128xf32>
    %266 = vector.broadcast %24 : f32 to vector<32x128xf32>
    %267 = arith.mulf %90, %266 : vector<32x128xf32>
    %268 = vector.broadcast %38 : f32 to vector<32x128xf32>
    %269 = arith.addf %267, %268 : vector<32x128xf32>
    %270 = vector.broadcast %25 : f32 to vector<32x128xf32>
    %271 = arith.mulf %93, %270 : vector<32x128xf32>
    %272 = arith.addf %269, %271 : vector<32x128xf32>
    %273 = vector.broadcast %26 : f32 to vector<32x128xf32>
    %274 = arith.mulf %96, %273 : vector<32x128xf32>
    %275 = arith.addf %272, %274 : vector<32x128xf32>
    %276 = vector.broadcast %27 : f32 to vector<32x128xf32>
    %277 = arith.mulf %99, %276 : vector<32x128xf32>
    %278 = arith.addf %275, %277 : vector<32x128xf32>
    %cst_159 = arith.constant 0.000000e+00 : f32
    %279 = vector.broadcast %cst_159 : f32 to vector<32x128xf32>
    %280 = arith.maximumf %278, %279 : vector<32x128xf32>
    %281 = vector.broadcast %46 : f32 to vector<32x128xf32>
    %282 = arith.mulf %280, %281 : vector<32x128xf32>
    %283 = arith.addf %256, %282 : vector<32x128xf32>
    %284 = vector.broadcast %54 : f32 to vector<32x128xf32>
    %285 = arith.mulf %280, %284 : vector<32x128xf32>
    %286 = arith.addf %259, %285 : vector<32x128xf32>
    %287 = vector.broadcast %62 : f32 to vector<32x128xf32>
    %288 = arith.mulf %280, %287 : vector<32x128xf32>
    %289 = arith.addf %262, %288 : vector<32x128xf32>
    %290 = vector.broadcast %70 : f32 to vector<32x128xf32>
    %291 = arith.mulf %280, %290 : vector<32x128xf32>
    %292 = arith.addf %265, %291 : vector<32x128xf32>
    %293 = vector.broadcast %28 : f32 to vector<32x128xf32>
    %294 = arith.mulf %90, %293 : vector<32x128xf32>
    %295 = vector.broadcast %39 : f32 to vector<32x128xf32>
    %296 = arith.addf %294, %295 : vector<32x128xf32>
    %297 = vector.broadcast %29 : f32 to vector<32x128xf32>
    %298 = arith.mulf %93, %297 : vector<32x128xf32>
    %299 = arith.addf %296, %298 : vector<32x128xf32>
    %300 = vector.broadcast %30 : f32 to vector<32x128xf32>
    %301 = arith.mulf %96, %300 : vector<32x128xf32>
    %302 = arith.addf %299, %301 : vector<32x128xf32>
    %303 = vector.broadcast %31 : f32 to vector<32x128xf32>
    %304 = arith.mulf %99, %303 : vector<32x128xf32>
    %305 = arith.addf %302, %304 : vector<32x128xf32>
    %cst_160 = arith.constant 0.000000e+00 : f32
    %306 = vector.broadcast %cst_160 : f32 to vector<32x128xf32>
    %307 = arith.maximumf %305, %306 : vector<32x128xf32>
    %308 = vector.broadcast %47 : f32 to vector<32x128xf32>
    %309 = arith.mulf %307, %308 : vector<32x128xf32>
    %310 = arith.addf %283, %309 : vector<32x128xf32>
    %311 = vector.broadcast %55 : f32 to vector<32x128xf32>
    %312 = arith.mulf %307, %311 : vector<32x128xf32>
    %313 = arith.addf %286, %312 : vector<32x128xf32>
    %314 = vector.broadcast %63 : f32 to vector<32x128xf32>
    %315 = arith.mulf %307, %314 : vector<32x128xf32>
    %316 = arith.addf %289, %315 : vector<32x128xf32>
    %317 = vector.broadcast %71 : f32 to vector<32x128xf32>
    %318 = arith.mulf %307, %317 : vector<32x128xf32>
    %319 = arith.addf %292, %318 : vector<32x128xf32>
    %cst_161 = arith.constant 0.000000e+00 : f32
    %320 = vector.broadcast %cst_161 : f32 to vector<32x128xf32>
    %321 = arith.maximumf %310, %320 : vector<32x128xf32>
    %322 = vector.broadcast %77 : f32 to vector<32x128xf32>
    %323 = arith.mulf %321, %322 : vector<32x128xf32>
    %324 = vector.broadcast %85 : f32 to vector<32x128xf32>
    %325 = arith.addf %323, %324 : vector<32x128xf32>
    %cst_162 = arith.constant 0.000000e+00 : f32
    %326 = vector.broadcast %cst_162 : f32 to vector<32x128xf32>
    %327 = arith.maximumf %313, %326 : vector<32x128xf32>
    %328 = vector.broadcast %79 : f32 to vector<32x128xf32>
    %329 = arith.mulf %327, %328 : vector<32x128xf32>
    %330 = arith.addf %325, %329 : vector<32x128xf32>
    %cst_163 = arith.constant 0.000000e+00 : f32
    %331 = vector.broadcast %cst_163 : f32 to vector<32x128xf32>
    %332 = arith.maximumf %316, %331 : vector<32x128xf32>
    %333 = vector.broadcast %81 : f32 to vector<32x128xf32>
    %334 = arith.mulf %332, %333 : vector<32x128xf32>
    %335 = arith.addf %330, %334 : vector<32x128xf32>
    %cst_164 = arith.constant 0.000000e+00 : f32
    %336 = vector.broadcast %cst_164 : f32 to vector<32x128xf32>
    %337 = arith.maximumf %319, %336 : vector<32x128xf32>
    %338 = vector.broadcast %83 : f32 to vector<32x128xf32>
    %339 = arith.mulf %337, %338 : vector<32x128xf32>
    %340 = arith.addf %335, %339 : vector<32x128xf32>
    %341 = math.exp %340 : vector<32x128xf32>
    %cst_165 = arith.constant 1.000000e+00 : f32
    %342 = vector.broadcast %cst_165 : f32 to vector<32x128xf32>
    %343 = arith.addf %342, %341 : vector<32x128xf32>
    %344 = tpu.reciprocal %343 {approx = true} : vector<32x128xf32> -> vector<32x128xf32>
    %345 = arith.index_cast %87 : i32 to index
    %c0_166 = arith.constant 0 : index
    %346 = vector.load %arg8[%345, %c0_166] : memref<32x128xf32, #tpu.memory_space<vmem>>, vector<32x128xf32>
    tpu.vector_store %arg8[%345, %c0_166], %344 {strides = array<i32>} : memref<32x128xf32, #tpu.memory_space<vmem>>, vector<32x128xf32>,
    %c1_i32 = arith.constant 1 : i32
    return
  }
  func.func @transform_0(%arg0: i32) -> (i32, i32, i32) {
    %c0_i32 = arith.constant 0 : i32
    %c0_i32_0 = arith.constant 0 : i32
    %c0_i32_1 = arith.constant 0 : i32
    return %c0_i32, %arg0, %c0_i32_0 : i32, i32, i32
  }
  func.func @transform_1(%arg0: i32) -> (i32, i32) {
    %c0_i32 = arith.constant 0 : i32
    %c0_i32_0 = arith.constant 0 : i32
    %c0_i32_1 = arith.constant 0 : i32
    return %c0_i32, %c0_i32_0 : i32, i32
  }
  func.func @transform_2(%arg0: i32) -> i32 {
    %c0_i32 = arith.constant 0 : i32
    %c0_i32_0 = arith.constant 0 : i32
    return %c0_i32 : i32
  }
  func.func @transform_3(%arg0: i32) -> (i32, i32) {
    %c0_i32 = arith.constant 0 : i32
    %c0_i32_0 = arith.constant 0 : i32
    %c0_i32_1 = arith.constant 0 : i32
    return %c0_i32, %c0_i32_0 : i32, i32
  }
  func.func @transform_4(%arg0: i32) -> i32 {
    %c0_i32 = arith.constant 0 : i32
    %c0_i32_0 = arith.constant 0 : i32
    return %c0_i32 : i32
  }
  func.func @transform_5(%arg0: i32) -> (i32, i32) {
    %c0_i32 = arith.constant 0 : i32
    %c0_i32_0 = arith.constant 0 : i32
    %c0_i32_1 = arith.constant 0 : i32
    return %c0_i32, %c0_i32_0 : i32, i32
  }
  func.func @transform_6(%arg0: i32) -> i32 {
    %c0_i32 = arith.constant 0 : i32
    %c0_i32_0 = arith.constant 0 : i32
    return %c0_i32 : i32
  }
  func.func @transform_7(%arg0: i32) -> (i32, i32) {
    %c0_i32 = arith.constant 0 : i32
    %c0_i32_0 = arith.constant 0 : i32
    return %arg0, %c0_i32 : i32, i32
  }
}

</mosaic_0001>

<llo_original>
// kernel: meta_model_forward.1
$region0: #{meta_model_forward.1}
  #allocation0 [shape = 'u32[]', space=smem, size = 0x4, offset = 0x4, fixed_abs, tag = 'smem constant byte address 0x4 - core index']
  #allocation1 [shape = 'u32[144,128]{1,0:T(1,128)}', space=vmem, size = 0x12000, scoped, tag = 'internal scratch']
  #allocation2 [shape = 'f32[1]{0:T(128)S(6)}', space=smem, size = 0x200, scoped, tag = 'scoped memory for meta_model_forward.1']
  %s0 = inlined_call_operand.vmem [shape: f32[4,32,128], index: 0, kind: input, shape index: {}]
  %s1 = inlined_call_operand.vmem [shape: f32[8,4], index: 1, kind: input, shape index: {}]
  %s2 = inlined_call_operand.vmem [shape: f32[8], index: 2, kind: input, shape index: {}]
  %s3 = inlined_call_operand.vmem [shape: f32[4,8], index: 3, kind: input, shape index: {}]
  %s4 = inlined_call_operand.vmem [shape: f32[4], index: 4, kind: input, shape index: {}]
  %s5 = inlined_call_operand.vmem [shape: f32[1,4], index: 5, kind: input, shape index: {}]
  %s6 = inlined_call_operand.<no memory space> [shape: f32[1], index: 6, kind: input, shape index: {}]
  %s7 = inlined_call_operand.vmem [shape: f32[32,128], index: 7, kind: output, shape index: {}]
  %s8 = sld [smem:[#allocation0]]
  $region58: #{meta_model_forward.1} parent=0
    _
  %s10 = ssub.s32 1, %s8
  %s11 = scalar_select 0, %s10, %s8
  %12 = sst [smem:[#allocation2]] %s6
  $region1: #{meta_model_forward.1} parent=0
    #allocation3 [shape = 'u8[4096]{0}', space=smem, size = 0x1000, scoped, tag = 'input window, operand 1, single buffered']
    #allocation4 [shape = 's32[1]{0}', space=sflag, size = 0x4, scoped, tag = 'scoped memory for meta_model_forward.1']
    #allocation5 [shape = 'u8[512]{0}', space=smem, size = 0x200, scoped, tag = 'input window, operand 2, single buffered']
    #allocation6 [shape = 's32[1]{0}', space=sflag, size = 0x4, scoped, tag = 'scoped memory for meta_model_forward.1']
    #allocation7 [shape = 'u8[2048]{0}', space=smem, size = 0x800, scoped, tag = 'input window, operand 3, single buffered']
    #allocation8 [shape = 'u8[512]{0}', space=smem, size = 0x200, scoped, tag = 'input window, operand 4, single buffered']
    #allocation9 [shape = 's32[1]{0}', space=sflag, size = 0x4, scoped, tag = 'scoped memory for meta_model_forward.1']
    #allocation10 [shape = 'u8[512]{0}', space=smem, size = 0x200, scoped, tag = 'input window, operand 5, single buffered']
    %13 = vsyncpa [#allocation4], 0
    %14 = vsyncpa [#allocation6], 0
    %15 = vsyncpa [#allocation9], 0
    // Predicated region
    $region2: #{meta_model_forward.1} parent=1 // pred_check
      _
    $region3: #{meta_model_forward.1} parent=1 // pred_check_branch
      %17 = sbr.rel (0) target = $region5
    $region4: #{meta_model_forward.1} parent=1 // pred_region
      _
    $region5: #{meta_model_forward.1} parent=1 // pred_fallthru
      _
    // Predicated region
    $region6: #{meta_model_forward.1} parent=1 // pred_check
      _
    $region7: #{meta_model_forward.1} parent=1 // pred_check_branch
      %19 = sbr.rel (0) target = $region9
    $region8: #{meta_model_forward.1} parent=1 // pred_region
      %s21 = ssub.s32 128, 128
      %22 = vsyncadd [#allocation4], %s21
      %s24 = sshll.u32 %s1, 4
      %s25 = int_to_ptr.vmem [resolvable:$true] %s24
      %27 = dma.vmem_to_smem %s25, 128, [#allocation3], [#allocation4]
    $region9: #{meta_model_forward.1} parent=1 // pred_fallthru
      _
    // Predicated region
    $region10: #{meta_model_forward.1} parent=1 // pred_check
      _
    $region11: #{meta_model_forward.1} parent=1 // pred_check_branch
      %29 = sbr.rel (0) target = $region13
    $region12: #{meta_model_forward.1} parent=1 // pred_region
      %s31 = ssub.s32 16, 16
      %32 = vsyncadd [#allocation6], %s31
      %s34 = sshll.u32 %s2, 4
      %s35 = int_to_ptr.vmem [resolvable:$true] %s34
      %37 = dma.vmem_to_smem %s35, 16, [#allocation5], [#allocation6]
    $region13: #{meta_model_forward.1} parent=1 // pred_fallthru
      _
    // Predicated region
    $region14: #{meta_model_forward.1} parent=1 // pred_check
      _
    $region15: #{meta_model_forward.1} parent=1 // pred_check_branch
      %39 = sbr.rel (0) target = $region17
    $region16: #{meta_model_forward.1} parent=1 // pred_region
      %s41 = ssub.s32 64, 64
      %42 = vsyncadd [#allocation6], %s41
      %s44 = sshll.u32 %s3, 4
      %s45 = int_to_ptr.vmem [resolvable:$true] %s44
      %47 = dma.vmem_to_smem %s45, 64, [#allocation7], [#allocation6]
    $region17: #{meta_model_forward.1} parent=1 // pred_fallthru
      _
    // Predicated region
    $region18: #{meta_model_forward.1} parent=1 // pred_check
      _
    $region19: #{meta_model_forward.1} parent=1 // pred_check_branch
      %49 = sbr.rel (0) target = $region21
    $region20: #{meta_model_forward.1} parent=1 // pred_region
      %s51 = ssub.s32 16, 16
      %52 = vsyncadd [#allocation9], %s51
      %s54 = sshll.u32 %s4, 4
      %s55 = int_to_ptr.vmem [resolvable:$true] %s54
      %57 = dma.vmem_to_smem %s55, 16, [#allocation8], [#allocation9]
    $region21: #{meta_model_forward.1} parent=1 // pred_fallthru
      _
    // Predicated region
    $region22: #{meta_model_forward.1} parent=1 // pred_check
      _
    $region23: #{meta_model_forward.1} parent=1 // pred_check_branch
      %59 = sbr.rel (0) target = $region25
    $region24: #{meta_model_forward.1} parent=1 // pred_region
      %s61 = ssub.s32 16, 16
      %62 = vsyncadd [#allocation9], %s61
      %s64 = sshll.u32 %s5, 4
      %s65 = int_to_ptr.vmem [resolvable:$true] %s64
      %67 = dma.vmem_to_smem %s65, 16, [#allocation10], [#allocation9]
    $region25: #{meta_model_forward.1} parent=1 // pred_fallthru
      _
    // Predicated region
    $region26: #{meta_model_forward.1} parent=1 // pred_check
      _
    $region27: #{meta_model_forward.1} parent=1 // pred_check_branch
      %69 = sbr.rel (0) target = $region29
    $region28: #{meta_model_forward.1} parent=1 // pred_region
      _
    $region29: #{meta_model_forward.1} parent=1 // pred_fallthru
      _
    // Predicated region
    $region30: #{meta_model_forward.1} parent=1 // pred_check
      _
    $region31: #{meta_model_forward.1} parent=1 // pred_check_branch
      %71 = sbr.rel (0) target = $region33
    $region32: #{meta_model_forward.1} parent=1 // pred_region
      %72 = dma.done [#allocation4], 128
    $region33: #{meta_model_forward.1} parent=1 // pred_fallthru
      _
    // Predicated region
    $region34: #{meta_model_forward.1} parent=1 // pred_check
      _
    $region35: #{meta_model_forward.1} parent=1 // pred_check_branch
      %74 = sbr.rel (0) target = $region37
    $region36: #{meta_model_forward.1} parent=1 // pred_region
      %75 = dma.done [#allocation6], 16
    $region37: #{meta_model_forward.1} parent=1 // pred_fallthru
      _
    // Predicated region
    $region38: #{meta_model_forward.1} parent=1 // pred_check
      _
    $region39: #{meta_model_forward.1} parent=1 // pred_check_branch
      %77 = sbr.rel (0) target = $region41
    $region40: #{meta_model_forward.1} parent=1 // pred_region
      %78 = dma.done [#allocation6], 64
    $region41: #{meta_model_forward.1} parent=1 // pred_fallthru
      _
    // Predicated region
    $region42: #{meta_model_forward.1} parent=1 // pred_check
      _
    $region43: #{meta_model_forward.1} parent=1 // pred_check_branch
      %80 = sbr.rel (0) target = $region45
    $region44: #{meta_model_forward.1} parent=1 // pred_region
      %81 = dma.done [#allocation9], 16
    $region45: #{meta_model_forward.1} parent=1 // pred_fallthru
      _
    // Predicated region
    $region46: #{meta_model_forward.1} parent=1 // pred_check
      _
    $region47: #{meta_model_forward.1} parent=1 // pred_check_branch
      %83 = sbr.rel (0) target = $region49
    $region48: #{meta_model_forward.1} parent=1 // pred_region
      %84 = dma.done [#allocation9], 16
    $region49: #{meta_model_forward.1} parent=1 // pred_fallthru
      _
    %85 = sfence
    %s86 = sld [smem:[#allocation3]]
    %s87 = sld [smem:[#allocation3 + $0x1]]
    %s88 = sld [smem:[#allocation3 + $0x2]]
    %s89 = sld [smem:[#allocation3 + $0x3]]
    %s90 = sld [smem:[#allocation3 + $0x80]]
    %s91 = sld [smem:[#allocation3 + $0x81]]
    %s92 = sld [smem:[#allocation3 + $0x82]]
    %s93 = sld [smem:[#allocation3 + $0x83]]
    %s94 = sld [smem:[#allocation3 + $0x100]]
    %s95 = sld [smem:[#allocation3 + $0x101]]
    %s96 = sld [smem:[#allocation3 + $0x102]]
    %s97 = sld [smem:[#allocation3 + $0x103]]
    %s98 = sld [smem:[#allocation3 + $0x180]]
    %s99 = sld [smem:[#allocation3 + $0x181]]
    %s100 = sld [smem:[#allocation3 + $0x182]]
    %s101 = sld [smem:[#allocation3 + $0x183]]
    %s102 = sld [smem:[#allocation3 + $0x200]]
    %s103 = sld [smem:[#allocation3 + $0x201]]
    %s104 = sld [smem:[#allocation3 + $0x202]]
    %s105 = sld [smem:[#allocation3 + $0x203]]
    %s106 = sld [smem:[#allocation3 + $0x280]]
    %s107 = sld [smem:[#allocation3 + $0x281]]
    %s108 = sld [smem:[#allocation3 + $0x282]]
    %s109 = sld [smem:[#allocation3 + $0x283]]
    %s110 = sld [smem:[#allocation3 + $0x300]]
    %s111 = sld [smem:[#allocation3 + $0x301]]
    %s112 = sld [smem:[#allocation3 + $0x302]]
    %s113 = sld [smem:[#allocation3 + $0x303]]
    %s114 = sld [smem:[#allocation3 + $0x380]]
    %s115 = sld [smem:[#allocation3 + $0x381]]
    %s116 = sld [smem:[#allocation3 + $0x382]]
    %s117 = sld [smem:[#allocation3 + $0x383]]
    %s118 = sld [smem:[#allocation5]]
    %s119 = sld [smem:[#allocation5 + $0x1]]
    %s120 = sld [smem:[#allocation5 + $0x2]]
    %s121 = sld [smem:[#allocation5 + $0x3]]
    %s122 = sld [smem:[#allocation5 + $0x4]]
    %s123 = sld [smem:[#allocation5 + $0x5]]
    %s124 = sld [smem:[#allocation5 + $0x6]]
    %s125 = sld [smem:[#allocation5 + $0x7]]
    %s126 = sld [smem:[#allocation7]]
    %s127 = sld [smem:[#allocation7 + $0x1]]
    %s128 = sld [smem:[#allocation7 + $0x2]]
    %s129 = sld [smem:[#allocation7 + $0x3]]
    %s130 = sld [smem:[#allocation7 + $0x4]]
    %s131 = sld [smem:[#allocation7 + $0x5]]
    %s132 = sld [smem:[#allocation7 + $0x6]]
    %s133 = sld [smem:[#allocation7 + $0x7]]
    %s134 = sld [smem:[#allocation7 + $0x80]]
    %s135 = sld [smem:[#allocation7 + $0x81]]
    %s136 = sld [smem:[#allocation7 + $0x82]]
    %s137 = sld [smem:[#allocation7 + $0x83]]
    %s138 = sld [smem:[#allocation7 + $0x84]]
    %s139 = sld [smem:[#allocation7 + $0x85]]
    %s140 = sld [smem:[#allocation7 + $0x86]]
    %s141 = sld [smem:[#allocation7 + $0x87]]
    %s142 = sld [smem:[#allocation7 + $0x100]]
    %s143 = sld [smem:[#allocation7 + $0x101]]
    %s144 = sld [smem:[#allocation7 + $0x102]]
    %s145 = sld [smem:[#allocation7 + $0x103]]
    %s146 = sld [smem:[#allocation7 + $0x104]]
    %s147 = sld [smem:[#allocation7 + $0x105]]
    %s148 = sld [smem:[#allocation7 + $0x106]]
    %s149 = sld [smem:[#allocation7 + $0x107]]
    %s150 = sld [smem:[#allocation7 + $0x180]]
    %s151 = sld [smem:[#allocation7 + $0x181]]
    %s152 = sld [smem:[#allocation7 + $0x182]]
    %s153 = sld [smem:[#allocation7 + $0x183]]
    %s154 = sld [smem:[#allocation7 + $0x184]]
    %s155 = sld [smem:[#allocation7 + $0x185]]
    %s156 = sld [smem:[#allocation7 + $0x186]]
    %s157 = sld [smem:[#allocation7 + $0x187]]
    %s158 = sld [smem:[#allocation8]]
    %s159 = sld [smem:[#allocation8 + $0x1]]
    %s160 = sld [smem:[#allocation8 + $0x2]]
    %s161 = sld [smem:[#allocation8 + $0x3]]
    %s162 = sld [smem:[#allocation10]]
    %s163 = ssub.f32 0.0, %s162
    %s164 = sld [smem:[#allocation10 + $0x1]]
    %s165 = ssub.f32 0.0, %s164
    %s166 = sld [smem:[#allocation10 + $0x2]]
    %s167 = ssub.f32 0.0, %s166
    %s168 = sld [smem:[#allocation10 + $0x3]]
    %s169 = ssub.f32 0.0, %s168
    %s170 = sld [smem:[#allocation2]]
    %s171 = ssub.f32 0.0, %s170
    %v172 = vld [vmem:[%s0] sm:$0xff]
    %v173 = vld [vmem:[%s0 + $0x8] sm:$0xff]
    %v174 = vld [vmem:[%s0 + $0x10] sm:$0xff]
    %v175 = vld [vmem:[%s0 + $0x18] sm:$0xff]
    %s176 = sadd.s32 0, 32
    %s177 = scalar_lea.vmem %s0, %s176
    %v178 = vld [vmem:[%s177] sm:$0xff]
    %v179 = vld [vmem:[%s177 + $0x8] sm:$0xff]
    %v180 = vld [vmem:[%s177 + $0x10] sm:$0xff]
    %v181 = vld [vmem:[%s177 + $0x18] sm:$0xff]
    %s182 = sadd.s32 0, 64
    %s183 = scalar_lea.vmem %s0, %s182
    %v184 = vld [vmem:[%s183] sm:$0xff]
    %v185 = vld [vmem:[%s183 + $0x8] sm:$0xff]
    %v186 = vld [vmem:[%s183 + $0x10] sm:$0xff]
    %v187 = vld [vmem:[%s183 + $0x18] sm:$0xff]
    %s188 = sadd.s32 0, 96
    %s189 = scalar_lea.vmem %s0, %s188
    %v190 = vld [vmem:[%s189] sm:$0xff]
    %v191 = vld [vmem:[%s189 + $0x8] sm:$0xff]
    %v192 = vld [vmem:[%s189 + $0x10] sm:$0xff]
    %v193 = vld [vmem:[%s189 + $0x18] sm:$0xff]
    %v194 = vstv %s86
    %v195 = vmul.f32 %v172, %v194
    %v196 = vmul.f32 %v173, %v194
    %v197 = vmul.f32 %v174, %v194
    %v198 = vmul.f32 %v175, %v194
    %v199 = vstv %s118
    %v200 = vadd.f32 %v195, %v199
    %v201 = vadd.f32 %v196, %v199
    %v202 = vadd.f32 %v197, %v199
    %v203 = vadd.f32 %v198, %v199
    %v204 = vstv %s87
    %v205 = vmul.f32 %v178, %v204
    %v206 = vmul.f32 %v179, %v204
    %v207 = vmul.f32 %v180, %v204
    %v208 = vmul.f32 %v181, %v204
    %v209 = vadd.f32 %v200, %v205
    %v210 = vadd.f32 %v201, %v206
    %v211 = vadd.f32 %v202, %v207
    %v212 = vadd.f32 %v203, %v208
    %v213 = vstv %s88
    %v214 = vmul.f32 %v184, %v213
    %v215 = vmul.f32 %v185, %v213
    %v216 = vmul.f32 %v186, %v213
    %v217 = vmul.f32 %v187, %v213
    %v218 = vadd.f32 %v209, %v214
    %v219 = vadd.f32 %v210, %v215
    %v220 = vadd.f32 %v211, %v216
    %v221 = vadd.f32 %v212, %v217
    %v222 = vstv %s89
    %v223 = vmul.f32 %v190, %v222
    %v224 = vmul.f32 %v191, %v222
    %v225 = vmul.f32 %v192, %v222
    %v226 = vmul.f32 %v193, %v222
    %v227 = vadd.f32 %v218, %v223
    %v228 = vadd.f32 %v219, %v224
    %v229 = vadd.f32 %v220, %v225
    %v230 = vadd.f32 %v221, %v226
    %v231 = vmax.f32 %v227, 0.0
    %v232 = vmax.f32 %v228, 0.0
    %v233 = vmax.f32 %v229, 0.0
    %v234 = vmax.f32 %v230, 0.0
    %v235 = vstv %s126
    %v236 = vmul.f32 %v231, %v235
    %v237 = vmul.f32 %v232, %v235
    %v238 = vmul.f32 %v233, %v235
    %v239 = vmul.f32 %v234, %v235
    %v240 = vstv %s158
    %v241 = vadd.f32 %v236, %v240
    %v242 = vadd.f32 %v237, %v240
    %v243 = vadd.f32 %v238, %v240
    %v244 = vadd.f32 %v239, %v240
    %v245 = vstv %s134
    %v246 = vmul.f32 %v231, %v245
    %v247 = vmul.f32 %v232, %v245
    %v248 = vmul.f32 %v233, %v245
    %v249 = vmul.f32 %v234, %v245
    %v250 = vstv %s159
    %v251 = vadd.f32 %v246, %v250
    %v252 = vadd.f32 %v247, %v250
    %v253 = vadd.f32 %v248, %v250
    %v254 = vadd.f32 %v249, %v250
    %v255 = vstv %s142
    %v256 = vmul.f32 %v231, %v255
    %v257 = vmul.f32 %v232, %v255
    %v258 = vmul.f32 %v233, %v255
    %v259 = vmul.f32 %v234, %v255
    %v260 = vstv %s160
    %v261 = vadd.f32 %v256, %v260
    %v262 = vadd.f32 %v257, %v260
    %v263 = vadd.f32 %v258, %v260
    %v264 = vadd.f32 %v259, %v260
    %v265 = vstv %s150
    %v266 = vmul.f32 %v231, %v265
    %v267 = vmul.f32 %v232, %v265
    %v268 = vmul.f32 %v233, %v265
    %v269 = vmul.f32 %v234, %v265
    %v270 = vstv %s161
    %v271 = vadd.f32 %v266, %v270
    %v272 = vadd.f32 %v267, %v270
    %v273 = vadd.f32 %v268, %v270
    %v274 = vadd.f32 %v269, %v270
    %v275 = vstv %s90
    %v276 = vmul.f32 %v172, %v275
    %v277 = vmul.f32 %v173, %v275
    %v278 = vmul.f32 %v174, %v275
    %v279 = vmul.f32 %v175, %v275
    %v280 = vstv %s119
    %v281 = vadd.f32 %v276, %v280
    %v282 = vadd.f32 %v277, %v280
    %v283 = vadd.f32 %v278, %v280
    %v284 = vadd.f32 %v279, %v280
    %v285 = vstv %s91
    %v286 = vmul.f32 %v178, %v285
    %v287 = vmul.f32 %v179, %v285
    %v288 = vmul.f32 %v180, %v285
    %v289 = vmul.f32 %v181, %v285
    %v290 = vadd.f32 %v281, %v286
    %v291 = vadd.f32 %v282, %v287
    %v292 = vadd.f32 %v283, %v288
    %v293 = vadd.f32 %v284, %v289
    %v294 = vstv %s92
    %v295 = vmul.f32 %v184, %v294
    %v296 = vmul.f32 %v185, %v294
    %v297 = vmul.f32 %v186, %v294
    %v298 = vmul.f32 %v187, %v294
    %v299 = vadd.f32 %v290, %v295
    %v300 = vadd.f32 %v291, %v296
    %v301 = vadd.f32 %v292, %v297
    %v302 = vadd.f32 %v293, %v298
    %v303 = vstv %s93
    %v304 = vmul.f32 %v190, %v303
    %v305 = vmul.f32 %v191, %v303
    %v306 = vmul.f32 %v192, %v303
    %v307 = vmul.f32 %v193, %v303
    %v308 = vadd.f32 %v299, %v304
    %v309 = vadd.f32 %v300, %v305
    %v310 = vadd.f32 %v301, %v306
    %v311 = vadd.f32 %v302, %v307
    %v312 = vmax.f32 %v308, 0.0
    %v313 = vmax.f32 %v309, 0.0
    %v314 = vmax.f32 %v310, 0.0
    %v315 = vmax.f32 %v311, 0.0
    %v316 = vstv %s127
    %v317 = vmul.f32 %v312, %v316
    %v318 = vmul.f32 %v313, %v316
    %v319 = vmul.f32 %v314, %v316
    %v320 = vmul.f32 %v315, %v316
    %v321 = vadd.f32 %v241, %v317
    %v322 = vadd.f32 %v242, %v318
    %v323 = vadd.f32 %v243, %v319
    %v324 = vadd.f32 %v244, %v320
    %v325 = vstv %s135
    %v326 = vmul.f32 %v312, %v325
    %v327 = vmul.f32 %v313, %v325
    %v328 = vmul.f32 %v314, %v325
    %v329 = vmul.f32 %v315, %v325
    %v330 = vadd.f32 %v251, %v326
    %v331 = vadd.f32 %v252, %v327
    %v332 = vadd.f32 %v253, %v328
    %v333 = vadd.f32 %v254, %v329
    %v334 = vstv %s143
    %v335 = vmul.f32 %v312, %v334
    %v336 = vmul.f32 %v313, %v334
    %v337 = vmul.f32 %v314, %v334
    %v338 = vmul.f32 %v315, %v334
    %v339 = vadd.f32 %v261, %v335
    %v340 = vadd.f32 %v262, %v336
    %v341 = vadd.f32 %v263, %v337
    %v342 = vadd.f32 %v264, %v338
    %v343 = vstv %s151
    %v344 = vmul.f32 %v312, %v343
    %v345 = vmul.f32 %v313, %v343
    %v346 = vmul.f32 %v314, %v343
    %v347 = vmul.f32 %v315, %v343
    %v348 = vadd.f32 %v271, %v344
    %v349 = vadd.f32 %v272, %v345
    %v350 = vadd.f32 %v273, %v346
    %v351 = vadd.f32 %v274, %v347
    %v352 = vstv %s94
    %v353 = vmul.f32 %v172, %v352
    %v354 = vmul.f32 %v173, %v352
    %v355 = vmul.f32 %v174, %v352
    %v356 = vmul.f32 %v175, %v352
    %v357 = vstv %s120
    %v358 = vadd.f32 %v353, %v357
    %v359 = vadd.f32 %v354, %v357
    %v360 = vadd.f32 %v355, %v357
    %v361 = vadd.f32 %v356, %v357
    %v362 = vstv %s95
    %v363 = vmul.f32 %v178, %v362
    %v364 = vmul.f32 %v179, %v362
    %v365 = vmul.f32 %v180, %v362
    %v366 = vmul.f32 %v181, %v362
    %v367 = vadd.f32 %v358, %v363
    %v368 = vadd.f32 %v359, %v364
    %v369 = vadd.f32 %v360, %v365
    %v370 = vadd.f32 %v361, %v366
    %v371 = vstv %s96
    %v372 = vmul.f32 %v184, %v371
    %v373 = vmul.f32 %v185, %v371
    %v374 = vmul.f32 %v186, %v371
    %v375 = vmul.f32 %v187, %v371
    %v376 = vadd.f32 %v367, %v372
    %v377 = vadd.f32 %v368, %v373
    %v378 = vadd.f32 %v369, %v374
    %v379 = vadd.f32 %v370, %v375
    %v380 = vstv %s97
    %v381 = vmul.f32 %v190, %v380
    %v382 = vmul.f32 %v191, %v380
    %v383 = vmul.f32 %v192, %v380
    %v384 = vmul.f32 %v193, %v380
    %v385 = vadd.f32 %v376, %v381
    %v386 = vadd.f32 %v377, %v382
    %v387 = vadd.f32 %v378, %v383
    %v388 = vadd.f32 %v379, %v384
    %v389 = vmax.f32 %v385, 0.0
    %v390 = vmax.f32 %v386, 0.0
    %v391 = vmax.f32 %v387, 0.0
    %v392 = vmax.f32 %v388, 0.0
    %v393 = vstv %s128
    %v394 = vmul.f32 %v389, %v393
    %v395 = vmul.f32 %v390, %v393
    %v396 = vmul.f32 %v391, %v393
    %v397 = vmul.f32 %v392, %v393
    %v398 = vadd.f32 %v321, %v394
    %v399 = vadd.f32 %v322, %v395
    %v400 = vadd.f32 %v323, %v396
    %v401 = vadd.f32 %v324, %v397
    %v402 = vstv %s136
    %v403 = vmul.f32 %v389, %v402
    %v404 = vmul.f32 %v390, %v402
    %v405 = vmul.f32 %v391, %v402
    %v406 = vmul.f32 %v392, %v402
    %v407 = vadd.f32 %v330, %v403
    %v408 = vadd.f32 %v331, %v404
    %v409 = vadd.f32 %v332, %v405
    %v410 = vadd.f32 %v333, %v406
    %v411 = vstv %s144
    %v412 = vmul.f32 %v389, %v411
    %v413 = vmul.f32 %v390, %v411
    %v414 = vmul.f32 %v391, %v411
    %v415 = vmul.f32 %v392, %v411
    %v416 = vadd.f32 %v339, %v412
    %v417 = vadd.f32 %v340, %v413
    %v418 = vadd.f32 %v341, %v414
    %v419 = vadd.f32 %v342, %v415
    %v420 = vstv %s152
    %v421 = vmul.f32 %v389, %v420
    %v422 = vmul.f32 %v390, %v420
    %v423 = vmul.f32 %v391, %v420
    %v424 = vmul.f32 %v392, %v420
    %v425 = vadd.f32 %v348, %v421
    %v426 = vadd.f32 %v349, %v422
    %v427 = vadd.f32 %v350, %v423
    %v428 = vadd.f32 %v351, %v424
    %v429 = vstv %s98
    %v430 = vmul.f32 %v172, %v429
    %v431 = vmul.f32 %v173, %v429
    %v432 = vmul.f32 %v174, %v429
    %v433 = vmul.f32 %v175, %v429
    %v434 = vstv %s121
    %v435 = vadd.f32 %v430, %v434
    %v436 = vadd.f32 %v431, %v434
    %v437 = vadd.f32 %v432, %v434
    %v438 = vadd.f32 %v433, %v434
    %v439 = vstv %s99
    %v440 = vmul.f32 %v178, %v439
    %v441 = vmul.f32 %v179, %v439
    %v442 = vmul.f32 %v180, %v439
    %v443 = vmul.f32 %v181, %v439
    %v444 = vadd.f32 %v435, %v440
    %v445 = vadd.f32 %v436, %v441
    %v446 = vadd.f32 %v437, %v442
    %v447 = vadd.f32 %v438, %v443
    %v448 = vstv %s100
    %v449 = vmul.f32 %v184, %v448
    %v450 = vmul.f32 %v185, %v448
    %v451 = vmul.f32 %v186, %v448
    %v452 = vmul.f32 %v187, %v448
    %v453 = vadd.f32 %v444, %v449
    %v454 = vadd.f32 %v445, %v450
    %v455 = vadd.f32 %v446, %v451
    %v456 = vadd.f32 %v447, %v452
    %v457 = vstv %s101
    %v458 = vmul.f32 %v190, %v457
    %v459 = vmul.f32 %v191, %v457
    %v460 = vmul.f32 %v192, %v457
    %v461 = vmul.f32 %v193, %v457
    %v462 = vadd.f32 %v453, %v458
    %v463 = vadd.f32 %v454, %v459
    %v464 = vadd.f32 %v455, %v460
    %v465 = vadd.f32 %v456, %v461
    %v466 = vmax.f32 %v462, 0.0
    %v467 = vmax.f32 %v463, 0.0
    %v468 = vmax.f32 %v464, 0.0
    %v469 = vmax.f32 %v465, 0.0
    %v470 = vstv %s129
    %v471 = vmul.f32 %v466, %v470
    %v472 = vmul.f32 %v467, %v470
    %v473 = vmul.f32 %v468, %v470
    %v474 = vmul.f32 %v469, %v470
    %v475 = vadd.f32 %v398, %v471
    %v476 = vadd.f32 %v399, %v472
    %v477 = vadd.f32 %v400, %v473
    %v478 = vadd.f32 %v401, %v474
    %v479 = vstv %s137
    %v480 = vmul.f32 %v466, %v479
    %v481 = vmul.f32 %v467, %v479
    %v482 = vmul.f32 %v468, %v479
    %v483 = vmul.f32 %v469, %v479
    %v484 = vadd.f32 %v407, %v480
    %v485 = vadd.f32 %v408, %v481
    %v486 = vadd.f32 %v409, %v482
    %v487 = vadd.f32 %v410, %v483
    %v488 = vstv %s145
    %v489 = vmul.f32 %v466, %v488
    %v490 = vmul.f32 %v467, %v488
    %v491 = vmul.f32 %v468, %v488
    %v492 = vmul.f32 %v469, %v488
    %v493 = vadd.f32 %v416, %v489
    %v494 = vadd.f32 %v417, %v490
    %v495 = vadd.f32 %v418, %v491
    %v496 = vadd.f32 %v419, %v492
    %v497 = vstv %s153
    %v498 = vmul.f32 %v466, %v497
    %v499 = vmul.f32 %v467, %v497
    %v500 = vmul.f32 %v468, %v497
    %v501 = vmul.f32 %v469, %v497
    %v502 = vadd.f32 %v425, %v498
    %v503 = vadd.f32 %v426, %v499
    %v504 = vadd.f32 %v427, %v500
    %v505 = vadd.f32 %v428, %v501
    %v506 = vstv %s102
    %v507 = vmul.f32 %v172, %v506
    %v508 = vmul.f32 %v173, %v506
    %v509 = vmul.f32 %v174, %v506
    %v510 = vmul.f32 %v175, %v506
    %v511 = vstv %s122
    %v512 = vadd.f32 %v507, %v511
    %v513 = vadd.f32 %v508, %v511
    %v514 = vadd.f32 %v509, %v511
    %v515 = vadd.f32 %v510, %v511
    %v516 = vstv %s103
    %v517 = vmul.f32 %v178, %v516
    %v518 = vmul.f32 %v179, %v516
    %v519 = vmul.f32 %v180, %v516
    %v520 = vmul.f32 %v181, %v516
    %v521 = vadd.f32 %v512, %v517
    %v522 = vadd.f32 %v513, %v518
    %v523 = vadd.f32 %v514, %v519
    %v524 = vadd.f32 %v515, %v520
    %v525 = vstv %s104
    %v526 = vmul.f32 %v184, %v525
    %v527 = vmul.f32 %v185, %v525
    %v528 = vmul.f32 %v186, %v525
    %v529 = vmul.f32 %v187, %v525
    %v530 = vadd.f32 %v521, %v526
    %v531 = vadd.f32 %v522, %v527
    %v532 = vadd.f32 %v523, %v528
    %v533 = vadd.f32 %v524, %v529
    %v534 = vstv %s105
    %v535 = vmul.f32 %v190, %v534
    %v536 = vmul.f32 %v191, %v534
    %v537 = vmul.f32 %v192, %v534
    %v538 = vmul.f32 %v193, %v534
    %v539 = vadd.f32 %v530, %v535
    %v540 = vadd.f32 %v531, %v536
    %v541 = vadd.f32 %v532, %v537
    %v542 = vadd.f32 %v533, %v538
    %v543 = vmax.f32 %v539, 0.0
    %v544 = vmax.f32 %v540, 0.0
    %v545 = vmax.f32 %v541, 0.0
    %v546 = vmax.f32 %v542, 0.0
    %v547 = vstv %s130
    %v548 = vmul.f32 %v543, %v547
    %v549 = vmul.f32 %v544, %v547
    %v550 = vmul.f32 %v545, %v547
    %v551 = vmul.f32 %v546, %v547
    %v552 = vadd.f32 %v475, %v548
    %v553 = vadd.f32 %v476, %v549
    %v554 = vadd.f32 %v477, %v550
    %v555 = vadd.f32 %v478, %v551
    %v556 = vstv %s138
    %v557 = vmul.f32 %v543, %v556
    %v558 = vmul.f32 %v544, %v556
    %v559 = vmul.f32 %v545, %v556
    %v560 = vmul.f32 %v546, %v556
    %v561 = vadd.f32 %v484, %v557
    %v562 = vadd.f32 %v485, %v558
    %v563 = vadd.f32 %v486, %v559
    %v564 = vadd.f32 %v487, %v560
    %v565 = vstv %s146
    %v566 = vmul.f32 %v543, %v565
    %v567 = vmul.f32 %v544, %v565
    %v568 = vmul.f32 %v545, %v565
    %v569 = vmul.f32 %v546, %v565
    %v570 = vadd.f32 %v493, %v566
    %v571 = vadd.f32 %v494, %v567
    %v572 = vadd.f32 %v495, %v568
    %v573 = vadd.f32 %v496, %v569
    %v574 = vstv %s154
    %v575 = vmul.f32 %v543, %v574
    %v576 = vmul.f32 %v544, %v574
    %v577 = vmul.f32 %v545, %v574
    %v578 = vmul.f32 %v546, %v574
    %v579 = vadd.f32 %v502, %v575
    %v580 = vadd.f32 %v503, %v576
    %v581 = vadd.f32 %v504, %v577
    %v582 = vadd.f32 %v505, %v578
    %v583 = vstv %s106
    %v584 = vmul.f32 %v172, %v583
    %v585 = vmul.f32 %v173, %v583
    %v586 = vmul.f32 %v174, %v583
    %v587 = vmul.f32 %v175, %v583
    %v588 = vstv %s123
    %v589 = vadd.f32 %v584, %v588
    %v590 = vadd.f32 %v585, %v588
    %v591 = vadd.f32 %v586, %v588
    %v592 = vadd.f32 %v587, %v588
    %v593 = vstv %s107
    %v594 = vmul.f32 %v178, %v593
    %v595 = vmul.f32 %v179, %v593
    %v596 = vmul.f32 %v180, %v593
    %v597 = vmul.f32 %v181, %v593
    %v598 = vadd.f32 %v589, %v594
    %v599 = vadd.f32 %v590, %v595
    %v600 = vadd.f32 %v591, %v596
    %v601 = vadd.f32 %v592, %v597
    %v602 = vstv %s108
    %v603 = vmul.f32 %v184, %v602
    %v604 = vmul.f32 %v185, %v602
    %v605 = vmul.f32 %v186, %v602
    %v606 = vmul.f32 %v187, %v602
    %v607 = vadd.f32 %v598, %v603
    %v608 = vadd.f32 %v599, %v604
    %v609 = vadd.f32 %v600, %v605
    %v610 = vadd.f32 %v601, %v606
    %v611 = vstv %s109
    %v612 = vmul.f32 %v190, %v611
    %v613 = vmul.f32 %v191, %v611
    %v614 = vmul.f32 %v192, %v611
    %v615 = vmul.f32 %v193, %v611
    %v616 = vadd.f32 %v607, %v612
    %v617 = vadd.f32 %v608, %v613
    %v618 = vadd.f32 %v609, %v614
    %v619 = vadd.f32 %v610, %v615
    %v620 = vmax.f32 %v616, 0.0
    %v621 = vmax.f32 %v617, 0.0
    %v622 = vmax.f32 %v618, 0.0
    %v623 = vmax.f32 %v619, 0.0
    %v624 = vstv %s131
    %v625 = vmul.f32 %v620, %v624
    %v626 = vmul.f32 %v621, %v624
    %v627 = vmul.f32 %v622, %v624
    %v628 = vmul.f32 %v623, %v624
    %v629 = vadd.f32 %v552, %v625
    %v630 = vadd.f32 %v553, %v626
    %v631 = vadd.f32 %v554, %v627
    %v632 = vadd.f32 %v555, %v628
    %v633 = vstv %s139
    %v634 = vmul.f32 %v620, %v633
    %v635 = vmul.f32 %v621, %v633
    %v636 = vmul.f32 %v622, %v633
    %v637 = vmul.f32 %v623, %v633
    %v638 = vadd.f32 %v561, %v634
    %v639 = vadd.f32 %v562, %v635
    %v640 = vadd.f32 %v563, %v636
    %v641 = vadd.f32 %v564, %v637
    %v642 = vstv %s147
    %v643 = vmul.f32 %v620, %v642
    %v644 = vmul.f32 %v621, %v642
    %v645 = vmul.f32 %v622, %v642
    %v646 = vmul.f32 %v623, %v642
    %v647 = vadd.f32 %v570, %v643
    %v648 = vadd.f32 %v571, %v644
    %v649 = vadd.f32 %v572, %v645
    %v650 = vadd.f32 %v573, %v646
    %v651 = vstv %s155
    %v652 = vmul.f32 %v620, %v651
    %v653 = vmul.f32 %v621, %v651
    %v654 = vmul.f32 %v622, %v651
    %v655 = vmul.f32 %v623, %v651
    %v656 = vadd.f32 %v579, %v652
    %v657 = vadd.f32 %v580, %v653
    %v658 = vadd.f32 %v581, %v654
    %v659 = vadd.f32 %v582, %v655
    %v660 = vstv %s110
    %v661 = vmul.f32 %v172, %v660
    %v662 = vmul.f32 %v173, %v660
    %v663 = vmul.f32 %v174, %v660
    %v664 = vmul.f32 %v175, %v660
    %v665 = vstv %s124
    %v666 = vadd.f32 %v661, %v665
    %v667 = vadd.f32 %v662, %v665
    %v668 = vadd.f32 %v663, %v665
    %v669 = vadd.f32 %v664, %v665
    %v670 = vstv %s111
    %v671 = vmul.f32 %v178, %v670
    %v672 = vmul.f32 %v179, %v670
    %v673 = vmul.f32 %v180, %v670
    %v674 = vmul.f32 %v181, %v670
    %v675 = vadd.f32 %v666, %v671
    %v676 = vadd.f32 %v667, %v672
    %v677 = vadd.f32 %v668, %v673
    %v678 = vadd.f32 %v669, %v674
    %v679 = vstv %s112
    %v680 = vmul.f32 %v184, %v679
    %v681 = vmul.f32 %v185, %v679
    %v682 = vmul.f32 %v186, %v679
    %v683 = vmul.f32 %v187, %v679
    %v684 = vadd.f32 %v675, %v680
    %v685 = vadd.f32 %v676, %v681
    %v686 = vadd.f32 %v677, %v682
    %v687 = vadd.f32 %v678, %v683
    %v688 = vstv %s113
    %v689 = vmul.f32 %v190, %v688
    %v690 = vmul.f32 %v191, %v688
    %v691 = vmul.f32 %v192, %v688
    %v692 = vmul.f32 %v193, %v688
    %v693 = vadd.f32 %v684, %v689
    %v694 = vadd.f32 %v685, %v690
    %v695 = vadd.f32 %v686, %v691
    %v696 = vadd.f32 %v687, %v692
    %v697 = vmax.f32 %v693, 0.0
    %v698 = vmax.f32 %v694, 0.0
    %v699 = vmax.f32 %v695, 0.0
    %v700 = vmax.f32 %v696, 0.0
    %v701 = vstv %s132
    %v702 = vmul.f32 %v697, %v701
    %v703 = vmul.f32 %v698, %v701
    %v704 = vmul.f32 %v699, %v701
    %v705 = vmul.f32 %v700, %v701
    %v706 = vadd.f32 %v629, %v702
    %v707 = vadd.f32 %v630, %v703
    %v708 = vadd.f32 %v631, %v704
    %v709 = vadd.f32 %v632, %v705
    %v710 = vstv %s140
    %v711 = vmul.f32 %v697, %v710
    %v712 = vmul.f32 %v698, %v710
    %v713 = vmul.f32 %v699, %v710
    %v714 = vmul.f32 %v700, %v710
    %v715 = vadd.f32 %v638, %v711
    %v716 = vadd.f32 %v639, %v712
    %v717 = vadd.f32 %v640, %v713
    %v718 = vadd.f32 %v641, %v714
    %v719 = vstv %s148
    %v720 = vmul.f32 %v697, %v719
    %v721 = vmul.f32 %v698, %v719
    %v722 = vmul.f32 %v699, %v719
    %v723 = vmul.f32 %v700, %v719
    %v724 = vadd.f32 %v647, %v720
    %v725 = vadd.f32 %v648, %v721
    %v726 = vadd.f32 %v649, %v722
    %v727 = vadd.f32 %v650, %v723
    %v728 = vstv %s156
    %v729 = vmul.f32 %v697, %v728
    %v730 = vmul.f32 %v698, %v728
    %v731 = vmul.f32 %v699, %v728
    %v732 = vmul.f32 %v700, %v728
    %v733 = vadd.f32 %v656, %v729
    %v734 = vadd.f32 %v657, %v730
    %v735 = vadd.f32 %v658, %v731
    %v736 = vadd.f32 %v659, %v732
    %v737 = vstv %s114
    %v738 = vmul.f32 %v172, %v737
    %v739 = vmul.f32 %v173, %v737
    %v740 = vmul.f32 %v174, %v737
    %v741 = vmul.f32 %v175, %v737
    %v742 = vstv %s125
    %v743 = vadd.f32 %v738, %v742
    %v744 = vadd.f32 %v739, %v742
    %v745 = vadd.f32 %v740, %v742
    %v746 = vadd.f32 %v741, %v742
    %v747 = vstv %s115
    %v748 = vmul.f32 %v178, %v747
    %v749 = vmul.f32 %v179, %v747
    %v750 = vmul.f32 %v180, %v747
    %v751 = vmul.f32 %v181, %v747
    %v752 = vadd.f32 %v743, %v748
    %v753 = vadd.f32 %v744, %v749
    %v754 = vadd.f32 %v745, %v750
    %v755 = vadd.f32 %v746, %v751
    %v756 = vstv %s116
    %v757 = vmul.f32 %v184, %v756
    %v758 = vmul.f32 %v185, %v756
    %v759 = vmul.f32 %v186, %v756
    %v760 = vmul.f32 %v187, %v756
    %v761 = vadd.f32 %v752, %v757
    %v762 = vadd.f32 %v753, %v758
    %v763 = vadd.f32 %v754, %v759
    %v764 = vadd.f32 %v755, %v760
    %v765 = vstv %s117
    %v766 = vmul.f32 %v190, %v765
    %v767 = vmul.f32 %v191, %v765
    %v768 = vmul.f32 %v192, %v765
    %v769 = vmul.f32 %v193, %v765
    %v770 = vadd.f32 %v761, %v766
    %v771 = vadd.f32 %v762, %v767
    %v772 = vadd.f32 %v763, %v768
    %v773 = vadd.f32 %v764, %v769
    %v774 = vmax.f32 %v770, 0.0
    %v775 = vmax.f32 %v771, 0.0
    %v776 = vmax.f32 %v772, 0.0
    %v777 = vmax.f32 %v773, 0.0
    %v778 = vstv %s133
    %v779 = vmul.f32 %v774, %v778
    %v780 = vmul.f32 %v775, %v778
    %v781 = vmul.f32 %v776, %v778
    %v782 = vmul.f32 %v777, %v778
    %v783 = vadd.f32 %v706, %v779
    %v784 = vadd.f32 %v707, %v780
    %v785 = vadd.f32 %v708, %v781
    %v786 = vadd.f32 %v709, %v782
    %v787 = vstv %s141
    %v788 = vmul.f32 %v774, %v787
    %v789 = vmul.f32 %v775, %v787
    %v790 = vmul.f32 %v776, %v787
    %v791 = vmul.f32 %v777, %v787
    %v792 = vadd.f32 %v715, %v788
    %v793 = vadd.f32 %v716, %v789
    %v794 = vadd.f32 %v717, %v790
    %v795 = vadd.f32 %v718, %v791
    %v796 = vstv %s149
    %v797 = vmul.f32 %v774, %v796
    %v798 = vmul.f32 %v775, %v796
    %v799 = vmul.f32 %v776, %v796
    %v800 = vmul.f32 %v777, %v796
    %v801 = vadd.f32 %v724, %v797
    %v802 = vadd.f32 %v725, %v798
    %v803 = vadd.f32 %v726, %v799
    %v804 = vadd.f32 %v727, %v800
    %v805 = vstv %s157
    %v806 = vmul.f32 %v774, %v805
    %v807 = vmul.f32 %v775, %v805
    %v808 = vmul.f32 %v776, %v805
    %v809 = vmul.f32 %v777, %v805
    %v810 = vadd.f32 %v733, %v806
    %v811 = vadd.f32 %v734, %v807
    %v812 = vadd.f32 %v735, %v808
    %v813 = vadd.f32 %v736, %v809
    %v814 = vmax.f32 %v783, 0.0
    %v815 = vmax.f32 %v784, 0.0
    %v816 = vmax.f32 %v785, 0.0
    %v817 = vmax.f32 %v786, 0.0
    %v818 = vstv %s163
    %v819 = vmul.f32 %v814, %v818
    %v820 = vmul.f32 %v815, %v818
    %v821 = vmul.f32 %v816, %v818
    %v822 = vmul.f32 %v817, %v818
    %v823 = vstv %s171
    %v824 = vadd.f32 %v819, %v823
    %v825 = vadd.f32 %v820, %v823
    %v826 = vadd.f32 %v821, %v823
    %v827 = vadd.f32 %v822, %v823
    %v828 = vmax.f32 %v792, 0.0
    %v829 = vmax.f32 %v793, 0.0
    %v830 = vmax.f32 %v794, 0.0
    %v831 = vmax.f32 %v795, 0.0
    %v832 = vstv %s165
    %v833 = vmul.f32 %v828, %v832
    %v834 = vmul.f32 %v829, %v832
    %v835 = vmul.f32 %v830, %v832
    %v836 = vmul.f32 %v831, %v832
    %v837 = vadd.f32 %v824, %v833
    %v838 = vadd.f32 %v825, %v834
    %v839 = vadd.f32 %v826, %v835
    %v840 = vadd.f32 %v827, %v836
    %v841 = vmax.f32 %v801, 0.0
    %v842 = vmax.f32 %v802, 0.0
    %v843 = vmax.f32 %v803, 0.0
    %v844 = vmax.f32 %v804, 0.0
    %v845 = vstv %s167
    %v846 = vmul.f32 %v841, %v845
    %v847 = vmul.f32 %v842, %v845
    %v848 = vmul.f32 %v843, %v845
    %v849 = vmul.f32 %v844, %v845
    %v850 = vadd.f32 %v837, %v846
    %v851 = vadd.f32 %v838, %v847
    %v852 = vadd.f32 %v839, %v848
    %v853 = vadd.f32 %v840, %v849
    %v854 = vmax.f32 %v810, 0.0
    %v855 = vmax.f32 %v811, 0.0
    %v856 = vmax.f32 %v812, 0.0
    %v857 = vmax.f32 %v813, 0.0
    %v858 = vstv %s169
    %v859 = vmul.f32 %v854, %v858
    %v860 = vmul.f32 %v855, %v858
    %v861 = vmul.f32 %v856, %v858
    %v862 = vmul.f32 %v857, %v858
    %v863 = vadd.f32 %v850, %v859
    %v864 = vadd.f32 %v851, %v860
    %v865 = vadd.f32 %v852, %v861
    %v866 = vadd.f32 %v853, %v862
    %v867 = vmul.f32 %v863, 1.442695
    %v868 = vpow.pop %v867
    %v869 = vmul.f32 %v864, 1.442695
    %v870 = vpow.pop %v869
    %v871 = vmul.f32 %v865, 1.442695
    %v872 = vpow.pop %v871
    %v873 = vmul.f32 %v866, 1.442695
    %v874 = vpow.pop %v873
    %v875 = vadd.f32 %v868, 1.0
    %v876 = vadd.f32 %v870, 1.0
    %v877 = vadd.f32 %v872, 1.0
    %v878 = vadd.f32 %v874, 1.0
    %v879 = vrcp.pop %v875
    %v880 = vrcp.pop %v876
    %v881 = vrcp.pop %v877
    %v882 = vrcp.pop %v878
    %883 = vst [vmem:[%s7] sm:$0xff] %v879
    %884 = vst [vmem:[%s7 + $0x8] sm:$0xff] %v880
    %885 = vst [vmem:[%s7 + $0x10] sm:$0xff] %v881
    %886 = vst [vmem:[%s7 + $0x18] sm:$0xff] %v882
    // Predicated region
    $region50: #{meta_model_forward.1} parent=1 // pred_check
      _
    $region51: #{meta_model_forward.1} parent=1 // pred_check_branch
      %888 = sbr.rel (0) target = $region53
    $region52: #{meta_model_forward.1} parent=1 // pred_region
      _
    $region53: #{meta_model_forward.1} parent=1 // pred_fallthru
      _
    // Predicated region
    $region54: #{meta_model_forward.1} parent=1 // pred_check
      _
    $region55: #{meta_model_forward.1} parent=1 // pred_check_branch
      %890 = sbr.rel (0) target = $region57
    $region56: #{meta_model_forward.1} parent=1 // pred_region
      _
    $region57: #{meta_model_forward.1} parent=1 // pred_fallthru
      _
    %891 = vsyncpa [#allocation4], 1
    %892 = vsyncpa [#allocation6], 1
    %893 = vsyncpa [#allocation9], 1

</llo_original>
